<compile_context>
chip_gen: v6e
topology: v6e:2x2x1
jax: 0.10.0
libtpu: 0.0.40
codegen_flags: <defaults>
</compile_context>

<pallas_src>
import math
import functools

import jax
import jax.numpy as jnp
from jax.experimental import pallas as pl
from jax.experimental.pallas import tpu as pltpu


def _round_up(x: int, m: int) -> int:
    return (x + m - 1) // m * m


def _pick_budgets():
    """(vmem_limit_bytes, packing_budget_bytes, big_vmem) per TPU generation."""
    try:
        vmem_cap = int(pltpu.get_tpu_info().vmem_capacity_bytes)
    except Exception:
        vmem_cap = 64 * 1024 * 1024  # conservative: v7x has 64 MiB per TensorCore
    if vmem_cap >= 100 * 1024 * 1024:          # v5e / v6e: 128 MiB
        return 100 * 1024 * 1024, 56 * 1024 * 1024, True
    return 48 * 1024 * 1024, 24 * 1024 * 1024, False


def _kernel_acc(x_ref, w_ref, b_ref, o_ref, acc_ref, *, precision):
    """Output dtype != f32: accumulate in an f32 scratch, cast in the epilogue.

    x_ref: (Mb, tm, tk)  w_ref: (Mb, tk, tn)  b_ref: (Mb, 1, tn) f32
    o_ref: (Mb, tm, tn)  acc_ref: (Mb, tm, tn) f32
    """
    k = pl.program_id(3)

    @pl.when(k == 0)
    def _():
        acc_ref[...] = jnp.zeros_like(acc_ref)

    acc_ref[...] += jnp.einsum(
        "mbk,mkn->mbn", x_ref[...], w_ref[...],
        preferred_element_type=jnp.float32, precision=precision)

    @pl.when(k == pl.num_programs(3) - 1)
    def _():
        o_ref[...] = (acc_ref[...] + b_ref[...]).astype(o_ref.dtype)


def _kernel_noacc(x_ref, w_ref, b_ref, o_ref, *, precision):
    """Output dtype == f32: accumulate directly into the resident output block
    (its block index is k-invariant), saving the scratch VMEM and the epilogue
    full-tile copy."""
    k = pl.program_id(3)

    @pl.when(k == 0)
    def _():
        o_ref[...] = jnp.zeros_like(o_ref)

    o_ref[...] += jnp.einsum(
        "mbk,mkn->mbn", x_ref[...], w_ref[...],
        preferred_element_type=jnp.float32, precision=precision)

    @pl.when(k == pl.num_programs(3) - 1)
    def _():
        o_ref[...] += b_ref[...]


def multilinear_forward(
    x,
    weights,
    bias,
    *,
    compute_dtype=jnp.bfloat16,   # fast path: bf16 MXU inputs, f32 accumulation
    precision=None,               # pass jax.lax.Precision.HIGHEST for f32 bit-parity
    tm=None,
    tn=None,
    tk=None,
    models_per_block=None,
    vmem_limit_bytes=None,
):
    """x: (n_models, B, K); weights: (n_models, K, N); bias: (n_models, 1, N)."""
    n_models, B, K = x.shape
    N = weights.shape[-1]
    assert weights.shape == (n_models, K, N)
    assert bias.shape == (n_models, 1, N)

    out_dtype = jnp.dtype(x.dtype)
    compute_dtype = jnp.dtype(compute_dtype)
    use_acc_scratch = out_dtype != jnp.float32

    auto_vmem_limit, packing_budget, big_vmem = _pick_budgets()
    if vmem_limit_bytes is None:
        vmem_limit_bytes = auto_vmem_limit

    # --- Tile sizes: lane dims multiples of 128, sublane dims multiples of the
    #     packed vreg height (16 for bf16, 8 for f32).
    sub = 16 if compute_dtype == jnp.bfloat16 else 8
    tn_cap = 512 if big_vmem else 256
    tk_cap = 1024 if big_vmem else 512
    if tm is None:
        # Prefer one M tile covering the whole batch -> weights stream once.
        tm = min(_round_up(B, sub), 512)
    if tn is None:
        tn = min(_round_up(N, 128), tn_cap)   # lane-dense output (unmasked vst)
    if tk is None:
        tk = min(_round_up(K, 128), tk_cap)

    Bp = _round_up(B, tm)
    Np = _round_up(N, tn)
    Kp = _round_up(K, tk)

    # --- Pack several models per grid step within a per-generation VMEM budget.
    #     Byte-correct estimate: compute dtype for x/w tiles, out dtype for the
    #     output tile, f32 for bias and (if present) the accumulator scratch.
    cb = compute_dtype.itemsize
    ob = out_dtype.itemsize
    auto_mb = models_per_block is None
    if auto_mb:
        per_model = (2 * (tm * tk + tk * tn) * cb   # double-buffered x & w tiles
                     + 2 * tn * 4                   # double-buffered bias tile (f32)
                     + 2 * tm * tn * ob)            # double-buffered output tile
        if use_acc_scratch:
            per_model += tm * tn * 4                # f32 accumulator scratch
        models_per_block = int(max(1, min(n_models, 32,
                                          packing_budget // max(per_model, 1))))
    Mb = models_per_block

    # Keep at least 2 iterations on a parallel grid axis when possible so the
    # second TensorCore on v7x-class parts is never idle (zero cost elsewhere).
    if auto_mb and n_models >= 2:
        if (_round_up(n_models, Mb) // Mb) * (Bp // tm) * (Np // tn) == 1:
            Mb = (n_models + 1) // 2
    Mp = _round_up(n_models, Mb)

    # --- Pad / cast only when actually needed (avoids extra HBM round trips).
    #     Padding is numerically inert: zero K-columns contribute nothing and
    #     padded rows/cols/models are sliced off below.
    def _prep(a, pads, dtype):
        if any(p != 0 for _, p in pads):
            a = jnp.pad(a, pads)
        if a.dtype != dtype:
            a = a.astype(dtype)
        return a

    xp = _prep(x, ((0, Mp - n_models), (0, Bp - B), (0, Kp - K)), compute_dtype)
    wp = _prep(weights, ((0, Mp - n_models), (0, Kp - K), (0, Np - N)), compute_dtype)
    bp = _prep(bias, ((0, Mp - n_models), (0, 0), (0, Np - N)), jnp.float32)

    grid = (Mp // Mb, Bp // tm, Np // tn, Kp // tk)
    n_i, n_j = grid[1], grid[2]

    cost = pl.CostEstimate(
        flops=2 * n_models * B * K * N,
        transcendentals=0,
        bytes_accessed=(xp.size * xp.dtype.itemsize * n_j     # x re-read per N tile
                        + wp.size * wp.dtype.itemsize * n_i   # w re-read per M tile
                        + bp.size * bp.dtype.itemsize
                        + Mp * Bp * Np * ob),
    )

    if use_acc_scratch:
        kernel = functools.partial(_kernel_acc, precision=precision)
        scratch_shapes = [pltpu.VMEM((Mb, tm, tn), jnp.float32)]
    else:
        kernel = functools.partial(_kernel_noacc, precision=precision)
        scratch_shapes = []

    out_padded = pl.pallas_call(
        kernel,
        out_shape=jax.ShapeDtypeStruct((Mp, Bp, Np), out_dtype),
        grid_spec=pltpu.PrefetchScalarGridSpec(
            num_scalar_prefetch=0,
            grid=grid,
            in_specs=[
                pl.BlockSpec((Mb, tm, tk), lambda m, i, j, k: (m, i, k)),
                pl.BlockSpec((Mb, tk, tn), lambda m, i, j, k: (m, k, j)),
                pl.BlockSpec((Mb, 1, tn), lambda m, i, j, k: (m, 0, j)),
            ],
            out_specs=pl.BlockSpec((Mb, tm, tn), lambda m, i, j, k: (m, i, j)),
            scratch_shapes=scratch_shapes,
        ),
        compiler_params=pltpu.CompilerParams(
            dimension_semantics=("parallel", "parallel", "parallel", "arbitrary"),
            vmem_limit_bytes=vmem_limit_bytes,
        ),
        cost_estimate=cost,
    )(xp, wp, bp)

    if (Mp, Bp, Np) == (n_models, B, N):
        return out_padded
    return out_padded[:n_models, :B, :N]


def init_params(key, n_models, size_in, size_out):
    """Deterministic init mirroring the PyTorch module's __init__.

    kaiming_uniform_(a=sqrt(5)) on a 3D tensor (n_models, size_in, size_out):
      fan_in = size_in * size_out  (PyTorch's _calculate_fan_in_and_fan_out)
      weight bound = sqrt(6 / ((1 + a^2) * fan_in)) = 1 / sqrt(fan_in)
      bias bound   = 1 / sqrt(fan_in)
    """
    kw, kb = jax.random.split(key)
    fan_in = size_in * size_out
    bound = 1.0 / math.sqrt(fan_in)
    weights = jax.random.uniform(
        kw, (n_models, size_in, size_out), jnp.float32, -bound, bound)
    bias = jax.random.uniform(
        kb, (n_models, 1, size_out), jnp.float32, -bound, bound)
    return weights, bias


def _reference(x, weights, bias):
    # Full-precision reference (same math as torch.matmul + broadcast add).
    return (jnp.matmul(x.astype(jnp.float32), weights,
                       precision=jax.lax.Precision.HIGHEST) + bias)


if __name__ == "__main__":
    # --- Test 1: module demo shape, exact f32 path (HIGHEST precision for
    #     bit-parity with the torch f32 reference), tight tolerance.
    n_models, batch, size_in, size_out = 4, 8, 32, 16
    key = jax.random.PRNGKey(0)
    kx, kp = jax.random.split(key)
    x = jax.random.normal(kx, (n_models, batch, size_in), jnp.float32)
    weights, bias = init_params(kp, n_models, size_in, size_out)

    out = jax.block_until_ready(multilinear_forward(
        x, weights, bias,
        compute_dtype=jnp.float32, precision=jax.lax.Precision.HIGHEST))
    ref = _reference(x, weights, bias)
    assert out.shape == (n_models, batch, size_out)
    assert jnp.allclose(out, ref, atol=1e-5, rtol=1e-5)

    # --- Test 2: exercises the full tiled (m, i, j, k) grid with padding on
    #     every axis (explicit small tiles so the grid has multiple steps).
    n_models2, batch2, size_in2, size_out2 = 5, 24, 320, 192
    kx2, kp2 = jax.random.split(jax.random.PRNGKey(1))
    x2 = jax.random.normal(kx2, (n_models2, batch2, size_in2), jnp.float32)
    w2, b2 = init_params(kp2, n_models2, size_in2, size_out2)

    out2 = jax.block_until_ready(multilinear_forward(
        x2, w2, b2, compute_dtype=jnp.float32,
        precision=jax.lax.Precision.HIGHEST,
        tm=8, tn=128, tk=128, models_per_block=2))
    ref2 = _reference(x2, w2, b2)
    assert out2.shape == ref2.shape
    assert jnp.allclose(out2, ref2, atol=1e-5, rtol=1e-5)

    # --- Test 3: default fast path (bf16 MXU inputs, f32 accumulation, f32
    #     output accumulated in-place in the output block), bf16 tolerance.
    out3 = jax.block_until_ready(multilinear_forward(x2, w2, b2))
    assert out3.shape == ref2.shape
    assert jnp.allclose(out3, ref2, atol=5e-3, rtol=5e-2)

    # --- Test 4: bf16 activations end-to-end (out dtype bf16) — exercises the
    #     f32-accumulator-scratch kernel variant.
    x4 = x2.astype(jnp.bfloat16)
    out4 = jax.block_until_ready(multilinear_forward(x4, w2, b2))
    assert out4.dtype == jnp.bfloat16
    assert jnp.allclose(out4.astype(jnp.float32), ref2, atol=2e-2, rtol=1e-1)

    print("KERNEL_OK")
</pallas_src>

<mosaic_0001>
module attributes {stable_mosaic.version = 11 : i64} {
  func.func @_kernel_noacc(%arg0: i32, %arg1: i32, %arg2: i32, %arg3: i32, %arg4: memref<2x8x128xf32, #tpu.memory_space<vmem>>, %arg5: memref<2x128x128xf32, #tpu.memory_space<vmem>>, %arg6: memref<2x1x128xf32, #tpu.memory_space<vmem>>, %arg7: memref<2x8x128xf32, #tpu.memory_space<vmem>>) attributes {dimension_semantics = [#tpu.dimension_semantics<parallel>, #tpu.dimension_semantics<parallel>, #tpu.dimension_semantics<parallel>, #tpu.dimension_semantics<arbitrary>], iteration_bounds = array<i64: 2, 1, 1, 1>, scalar_prefetch = 0 : i64, scratch_operands = 0 : i64, tpu.core_type = #tpu.core_type<tc>, window_params = [{transform_indices = @transform_0, window_bounds = array<i64: 2, 8, 128>}, {transform_indices = @transform_1, window_bounds = array<i64: 2, 128, 128>}, {transform_indices = @transform_2, window_bounds = array<i64: 2, 1, 128>}, {transform_indices = @transform_3, window_bounds = array<i64: 2, 8, 128>}]} {
    %c0_i32 = arith.constant 0 : i32
    %0 = arith.cmpi eq, %arg3, %c0_i32 : i32
    %1 = arith.extui %0 : i1 to i32
    %c0_i32_0 = arith.constant 0 : i32
    %2 = arith.cmpi ne, %1, %c0_i32_0 : i32
    scf.if %2 {
      %cst_14 = arith.constant 0.000000e+00 : f32
      %12 = vector.broadcast %cst_14 : f32 to vector<2x8x128xf32>
      %c0_15 = arith.constant 0 : index
      %c0_16 = arith.constant 0 : index
      %c0_17 = arith.constant 0 : index
      %13 = vector.load %arg7[%c0_15, %c0_16, %c0_17] : memref<2x8x128xf32, #tpu.memory_space<vmem>>, vector<2x8x128xf32>
      tpu.vector_store %arg7[%c0_15, %c0_16, %c0_17], %12 {strides = array<i32>} : memref<2x8x128xf32, #tpu.memory_space<vmem>>, vector<2x8x128xf32>,
    } else {
    }
    %c0 = arith.constant 0 : index
    %c0_1 = arith.constant 0 : index
    %c0_2 = arith.constant 0 : index
    %3 = vector.load %arg7[%c0, %c0_1, %c0_2] : memref<2x8x128xf32, #tpu.memory_space<vmem>>, vector<2x8x128xf32>
    %c0_3 = arith.constant 0 : index
    %c0_4 = arith.constant 0 : index
    %c0_5 = arith.constant 0 : index
    %4 = vector.load %arg4[%c0_3, %c0_4, %c0_5] : memref<2x8x128xf32, #tpu.memory_space<vmem>>, vector<2x8x128xf32>
    %c0_6 = arith.constant 0 : index
    %c0_7 = arith.constant 0 : index
    %c0_8 = arith.constant 0 : index
    %5 = vector.load %arg5[%c0_6, %c0_7, %c0_8] : memref<2x128x128xf32, #tpu.memory_space<vmem>>, vector<2x128x128xf32>
    "tpu.trace_start"() <{level = 10 : i32, message = "mbk,mkn->mbn"}> : () -> ()
    %cst = arith.constant dense<0.000000e+00> : vector<2x8x128xf32>
    %6 = tpu.matmul %4, %5, %cst {dimension_numbers = #tpu.dot_dimension_numbers<[2], [1], [1], [2], [0, 0, 0, 1, 1, 2], [0], [0]>, precision = #tpu.contract_precision<fp32>} : vector<2x8x128xf32>, vector<2x128x128xf32>, vector<2x8x128xf32> -> vector<2x8x128xf32>
    "tpu.trace_stop"() : () -> ()
    %7 = arith.addf %3, %6 : vector<2x8x128xf32>
    %c0_9 = arith.constant 0 : index
    %c0_10 = arith.constant 0 : index
    %c0_11 = arith.constant 0 : index
    %8 = vector.load %arg7[%c0_9, %c0_10, %c0_11] : memref<2x8x128xf32, #tpu.memory_space<vmem>>, vector<2x8x128xf32>
    tpu.vector_store %arg7[%c0_9, %c0_10, %c0_11], %7 {strides = array<i32>} : memref<2x8x128xf32, #tpu.memory_space<vmem>>, vector<2x8x128xf32>,
    %c0_i32_12 = arith.constant 0 : i32
    %9 = arith.cmpi eq, %arg3, %c0_i32_12 : i32
    %10 = arith.extui %9 : i1 to i32
    %c0_i32_13 = arith.constant 0 : i32
    %11 = arith.cmpi ne, %10, %c0_i32_13 : i32
    scf.if %11 {
      %c0_14 = arith.constant 0 : index
      %c0_15 = arith.constant 0 : index
      %c0_16 = arith.constant 0 : index
      %12 = vector.load %arg7[%c0_14, %c0_15, %c0_16] : memref<2x8x128xf32, #tpu.memory_space<vmem>>, vector<2x8x128xf32>
      %c0_17 = arith.constant 0 : index
      %c0_18 = arith.constant 0 : index
      %c0_19 = arith.constant 0 : index
      %13 = vector.load %arg6[%c0_17, %c0_18, %c0_19] : memref<2x1x128xf32, #tpu.memory_space<vmem>>, vector<2x1x128xf32>
      %14 = vector.broadcast %13 : vector<2x1x128xf32> to vector<2x8x128xf32>
      %15 = arith.addf %12, %14 : vector<2x8x128xf32>
      %c0_20 = arith.constant 0 : index
      %c0_21 = arith.constant 0 : index
      %c0_22 = arith.constant 0 : index
      %16 = vector.load %arg7[%c0_20, %c0_21, %c0_22] : memref<2x8x128xf32, #tpu.memory_space<vmem>>, vector<2x8x128xf32>
      tpu.vector_store %arg7[%c0_20, %c0_21, %c0_22], %15 {strides = array<i32>} : memref<2x8x128xf32, #tpu.memory_space<vmem>>, vector<2x8x128xf32>,
    } else {
    }
    return
  }
  func.func @transform_0(%arg0: i32, %arg1: i32, %arg2: i32, %arg3: i32) -> (i32, i32, i32) {
    %c0_i32 = arith.constant 0 : i32
    return %arg0, %arg1, %arg3 : i32, i32, i32
  }
  func.func @transform_1(%arg0: i32, %arg1: i32, %arg2: i32, %arg3: i32) -> (i32, i32, i32) {
    %c0_i32 = arith.constant 0 : i32
    return %arg0, %arg3, %arg2 : i32, i32, i32
  }
  func.func @transform_2(%arg0: i32, %arg1: i32, %arg2: i32, %arg3: i32) -> (i32, i32, i32) {
    %c0_i32 = arith.constant 0 : i32
    %c0_i32_0 = arith.constant 0 : i32
    return %arg0, %c0_i32, %arg2 : i32, i32, i32
  }
  func.func @transform_3(%arg0: i32, %arg1: i32, %arg2: i32, %arg3: i32) -> (i32, i32, i32) {
    %c0_i32 = arith.constant 0 : i32
    return %arg0, %arg1, %arg2 : i32, i32, i32
  }
}

</mosaic_0001>

<llo_original>
// kernel: tpu_custom_call.1
$region0: #{tpu_custom_call.1}
  #allocation0 [shape = 'u32[]', space=smem, size = 0x4, offset = 0x4, fixed_abs, tag = 'smem constant byte address 0x4 - core index']
  #allocation1 [shape = 'u32[144,128]{1,0:T(1,128)}', space=vmem, size = 0x12000, scoped, tag = 'internal scratch']
  %s0 = inlined_call_operand.hbm [shape: f32[4,8,128], index: 0, kind: input, shape index: {}]
  %s1 = inlined_call_operand.hbm [shape: f32[4,128,128], index: 1, kind: input, shape index: {}]
  %s2 = inlined_call_operand.hbm [shape: f32[4,1,128], index: 2, kind: input, shape index: {}]
  %s3 = inlined_call_operand.hbm [shape: f32[4,8,128], index: 3, kind: output, shape index: {}]
  %s4 = sld [smem:[#allocation0]]
  $region65: #{tpu_custom_call.1} parent=0
    _
  %s6 = ssub.s32 1, %s4
  %s7 = scalar_select 0, %s6, %s4
  $region1: #{tpu_custom_call.1} parent=0
    #allocation2 [shape = 'u8[16384]{0}', space=vmem, size = 0x4000, scoped, tag = 'input window, operand 0']
    #allocation3 [shape = 's32[2]{0}', space=sflag, size = 0x8, scoped, tag = 'scoped memory for tpu_custom_call.1']
    #allocation4 [shape = 's32[2]{0}', space=sflag, size = 0x8, scoped, tag = 'scoped memory for tpu_custom_call.1']
    #allocation5 [shape = 'u8[262144]{0}', space=vmem, size = 0x40000, scoped, tag = 'input window, operand 1']
    #allocation6 [shape = 's32[2]{0}', space=sflag, size = 0x8, scoped, tag = 'scoped memory for tpu_custom_call.1']
    #allocation7 [shape = 'u8[2048]{0}', space=vmem, size = 0x800, scoped, tag = 'input window, operand 2']
    #allocation8 [shape = 'u8[16384]{0}', space=vmem, size = 0x4000, scoped, tag = 'output window, operand 0']
    %8 = vsyncpa [#allocation3], 0
    %s9 = scalar_lea.sflag [#allocation3], 1
    %10 = vsyncpa %s9, 0
    %11 = vsyncpa [#allocation6], 0
    %s12 = scalar_lea.sflag [#allocation6], 1
    %13 = vsyncpa %s12, 0
    %14 = vsyncpa [#allocation4], 0
    %s15 = scalar_lea.sflag [#allocation4], 1
    %16 = vsyncpa %s15, 0
    loop: start=0, step=1, limit=4
    $region2: #{tpu_custom_call.1} parent=1 // loop_pre_header
      _
    $region3: #{tpu_custom_call.1} parent=1 // loop_header
      %s18 = sphi 0, %s22
      %p19 = scmp.ge.s32.totalorder %s18, 4
      %s25 = sphi 0, %s51
      %s26 = sphi 0, %s47
      %s27 = sphi 0, %s43
      %s28 = sphi 0, %s39
      %s29 = sphi 0, %s25
      %s30 = sphi 0, %s26
      %s31 = sphi 0, %s27
      %s32 = sphi 0, %s28
      %s33 = sphi 0, %s29
      %s34 = sphi 0, %s30
      %s35 = sphi 0, %s31
      %s36 = sphi 0, %s32
      %s58 = sphi 0, %s60
      %s61 = sphi 0, %s58
      %s62 = sphi 0, %s61
      %s78 = sphi 0, %s62
      %s88 = sphi 0, %s90
      %s91 = sphi 0, %s88
      %s92 = sphi 0, %s91
      %s108 = sphi 0, %s92
      %s116 = sphi 0, %s118
      %s119 = sphi 0, %s116
      %s120 = sphi 0, %s119
      %s136 = sphi 0, %s120
      %s146 = sphi 0, %s148
      %s149 = sphi 0, %s146
      %s150 = sphi 0, %s149
      %s166 = sphi 0, %s150
    $region4: #{tpu_custom_call.1} parent=1 // loop_header_branch
      %21 = sbr.rel (%p19) target = $region8
    $region5: #{tpu_custom_call.1} parent=1 // loop_body
      %s23 = ssub.s32 %s18, 1
      %s24 = ssub.s32 %s18, 2
      %s37 = sadd.s32 1, %s28
      %p38 = scmp.ge.s32.totalorder %s37, 1
      %s39 = scalar_select %p38, 0, %s37
      %s40 = sadd.s32 1, %s27
      %s41 = scalar_select %p38, %s40, %s27
      %p42 = scmp.ge.s32.totalorder %s41, 1
      %s43 = scalar_select %p42, 0, %s41
      %s44 = sadd.s32 1, %s26
      %s45 = scalar_select %p42, %s44, %s26
      %p46 = scmp.ge.s32.totalorder %s45, 1
      %s47 = scalar_select %p46, 0, %s45
      %s48 = sadd.s32 1, %s25
      %s49 = scalar_select %p46, %s48, %s25
      %p50 = scmp.ge.s32.totalorder %s49, 2
      %s51 = scalar_select %p50, 0, %s49
      %s52 = ssub.s32 %s25, %s51
      %s53 = ssub.s32 %s26, %s47
      %s54 = sor.u32 %s52, %s53
      %s55 = ssub.s32 %s28, %s39
      %s56 = sor.u32 %s54, %s55
      %p57 = scmp.eq.s32.totalorder %s56, 0
      %s59 = sadd.s32 %s58, 1
      %s60 = scalar_select %p57, %s58, %s59
      %p63 = pneg %p57
      %p64 = scmp.eq.s32.totalorder %s18, 1
      %p65 = por %p63, %p64
      %p66 = scmp.ne.s32.totalorder %s58, %s61
      %p67 = scmp.eq.s32.totalorder %s18, 0
      %p68 = por %p66, %p67
      %p69 = scmp.ne.s32.totalorder %s58, %s61
      %p70 = scmp.eq.s32.totalorder %s23, 1
      %p71 = por %p69, %p70
      %p72 = scmp.ne.s32.totalorder %s61, %s62
      %p73 = scmp.eq.s32.totalorder %s23, 0
      %p74 = por %p72, %p73
      %p75 = scmp.ne.s32.totalorder %s61, %s62
      %p76 = scmp.eq.s32.totalorder %s24, 1
      %p77 = por %p75, %p76
      %p79 = scmp.ne.s32.totalorder %s62, %s78
      %p80 = scmp.eq.s32.totalorder %s24, 0
      %p81 = por %p79, %p80
      %s82 = ssub.s32 %s25, %s51
      %s83 = ssub.s32 %s28, %s39
      %s84 = sor.u32 %s82, %s83
      %s85 = ssub.s32 %s27, %s43
      %s86 = sor.u32 %s84, %s85
      %p87 = scmp.eq.s32.totalorder %s86, 0
      %s89 = sadd.s32 %s88, 1
      %s90 = scalar_select %p87, %s88, %s89
      %p93 = pneg %p87
      %p94 = scmp.eq.s32.totalorder %s18, 1
      %p95 = por %p93, %p94
      %p96 = scmp.ne.s32.totalorder %s88, %s91
      %p97 = scmp.eq.s32.totalorder %s18, 0
      %p98 = por %p96, %p97
      %p99 = scmp.ne.s32.totalorder %s88, %s91
      %p100 = scmp.eq.s32.totalorder %s23, 1
      %p101 = por %p99, %p100
      %p102 = scmp.ne.s32.totalorder %s91, %s92
      %p103 = scmp.eq.s32.totalorder %s23, 0
      %p104 = por %p102, %p103
      %p105 = scmp.ne.s32.totalorder %s91, %s92
      %p106 = scmp.eq.s32.totalorder %s24, 1
      %p107 = por %p105, %p106
      %p109 = scmp.ne.s32.totalorder %s92, %s108
      %p110 = scmp.eq.s32.totalorder %s24, 0
      %p111 = por %p109, %p110
      %s112 = ssub.s32 %s25, %s51
      %s113 = ssub.s32 %s27, %s43
      %s114 = sor.u32 %s112, %s113
      %p115 = scmp.eq.s32.totalorder %s114, 0
      %s117 = sadd.s32 %s116, 1
      %s118 = scalar_select %p115, %s116, %s117
      %p121 = pneg %p115
      %p122 = scmp.eq.s32.totalorder %s18, 1
      %p123 = por %p121, %p122
      %p124 = scmp.ne.s32.totalorder %s116, %s119
      %p125 = scmp.eq.s32.totalorder %s18, 0
      %p126 = por %p124, %p125
      %p127 = scmp.ne.s32.totalorder %s116, %s119
      %p128 = scmp.eq.s32.totalorder %s23, 1
      %p129 = por %p127, %p128
      %p130 = scmp.ne.s32.totalorder %s119, %s120
      %p131 = scmp.eq.s32.totalorder %s23, 0
      %p132 = por %p130, %p131
      %p133 = scmp.ne.s32.totalorder %s119, %s120
      %p134 = scmp.eq.s32.totalorder %s24, 1
      %p135 = por %p133, %p134
      %p137 = scmp.ne.s32.totalorder %s120, %s136
      %p138 = scmp.eq.s32.totalorder %s24, 0
      %p139 = por %p137, %p138
      %s140 = ssub.s32 %s25, %s51
      %s141 = ssub.s32 %s26, %s47
      %s142 = sor.u32 %s140, %s141
      %s143 = ssub.s32 %s27, %s43
      %s144 = sor.u32 %s142, %s143
      %p145 = scmp.eq.s32.totalorder %s144, 0
      %s147 = sadd.s32 %s146, 1
      %s148 = scalar_select %p145, %s146, %s147
      %p151 = pneg %p145
      %p152 = scmp.eq.s32.totalorder %s18, 1
      %p153 = por %p151, %p152
      %p154 = scmp.ne.s32.totalorder %s146, %s149
      %p155 = scmp.eq.s32.totalorder %s18, 0
      %p156 = por %p154, %p155
      %p157 = scmp.ne.s32.totalorder %s146, %s149
      %p158 = scmp.eq.s32.totalorder %s23, 1
      %p159 = por %p157, %p158
      %p160 = scmp.ne.s32.totalorder %s149, %s150
      %p161 = scmp.eq.s32.totalorder %s23, 0
      %p162 = por %p160, %p161
      %p163 = scmp.ne.s32.totalorder %s149, %s150
      %p164 = scmp.eq.s32.totalorder %s24, 1
      %p165 = por %p163, %p164
      %p167 = scmp.ne.s32.totalorder %s150, %s166
      %p168 = scmp.eq.s32.totalorder %s24, 0
      %p169 = por %p167, %p168
      %p170 = scmp.le.s32.totalorder 1, %s18
      %p171 = scmp.lt.s32.totalorder %s18, 3
      %p172 = pnand %p170, %p171
      %p173 = pneg %p172
      // Predicated region
      $region9: #{tpu_custom_call.1} parent=5 // pred_check
        _
      $region10: #{tpu_custom_call.1} parent=5 // pred_check_branch
        %175 = sbr.rel (%p172) target = $region12
      $region11: #{tpu_custom_call.1} parent=5 // pred_region
        %s176 = ssub.s32 %s18, 1
      $region12: #{tpu_custom_call.1} parent=5 // pred_fallthru
        _
      %p177 = scmp.lt.s32.totalorder %s18, 2
      // Predicated region
      $region13: #{tpu_custom_call.1} parent=5 // pred_check
        %p178 = pneg %p177
      $region14: #{tpu_custom_call.1} parent=5 // pred_check_branch
        %180 = sbr.rel (%p178) target = $region16
      $region15: #{tpu_custom_call.1} parent=5 // pred_region
        // Predicated region
        $region17: #{tpu_custom_call.1} parent=15 // pred_check
          %p181 = pneg %p68
        $region18: #{tpu_custom_call.1} parent=15 // pred_check_branch
          %183 = sbr.rel (%p181) target = $region20
        $region19: #{tpu_custom_call.1} parent=15 // pred_region
          %s184 = sand.u32 %s58, 1
          %s185 = scalar_lea.sflag [#allocation3], %s184
          %s186 = sand.u32 %s58, 1
          %s187 = smul.addr %s186, 16
          %s188 = scalar_lea.vmem [#allocation2], %s187
          %s189 = smul.u32 2, %s25
          %s191 = ssub.s32 256, 256
          %192 = vsyncadd %s185, %s191
          %s193 = sadd.s32 %s28, %s26
          %s194 = sadd.s32 %s193, %s189
          %s195 = smul.addr %s194, 128
          %s196 = scalar_lea.hbm %s0, %s195
          %s197 = sshll.u32 %s188, 4
          %s198 = int_to_ptr.vmem [resolvable:$true] %s197
          %203 = dma.hbm_to_vmem [thread:$0]  %s196, 256, %s198, %s185, 128, 128, 8
        $region20: #{tpu_custom_call.1} parent=15 // pred_fallthru
          _
        // Predicated region
        $region21: #{tpu_custom_call.1} parent=15 // pred_check
          %p204 = pneg %p98
        $region22: #{tpu_custom_call.1} parent=15 // pred_check_branch
          %206 = sbr.rel (%p204) target = $region24
        $region23: #{tpu_custom_call.1} parent=15 // pred_region
          %s207 = sand.u32 %s18, 1
          %s208 = scalar_lea.sflag [#allocation6], %s207
          %s209 = sand.u32 %s88, 1
          %s210 = smul.addr %s209, 256
          %s211 = scalar_lea.vmem [#allocation5], %s210
          %s212 = smul.u32 2, %s25
          %s213 = smul.u32 16, %s28
          %s215 = ssub.s32 4096, 4096
          %216 = vsyncadd %s208, %s215
          %s217 = sadd.s32 %s27, %s213
          %s218 = smul.addr %s212, 16
          %s219 = sadd.s32 %s217, %s218
          %s220 = smul.addr %s219, 128
          %s221 = scalar_lea.hbm %s1, %s220
          %s222 = sshll.u32 %s211, 4
          %s223 = int_to_ptr.vmem [resolvable:$true] %s222
          %228 = dma.hbm_to_vmem [thread:$0]  %s221, 4096, %s223, %s208, 128, 128, 8
        $region24: #{tpu_custom_call.1} parent=15 // pred_fallthru
          _
        // Predicated region
        $region25: #{tpu_custom_call.1} parent=15 // pred_check
          %p229 = pneg %p126
        $region26: #{tpu_custom_call.1} parent=15 // pred_check_branch
          %231 = sbr.rel (%p229) target = $region28
        $region27: #{tpu_custom_call.1} parent=15 // pred_region
          %s232 = sand.u32 %s18, 1
          %s233 = scalar_lea.sflag [#allocation6], %s232
          %s234 = sand.u32 %s116, 1
          %s235 = smul.addr %s234, 2
          %s236 = scalar_lea.vmem [#allocation7], %s235
          %s237 = smul.u32 2, %s25
          %s239 = ssub.s32 32, 32
          %240 = vsyncadd %s233, %s239
          %s241 = sadd.s32 %s27, %s237
          %s242 = smul.addr %s241, 16
          %s243 = scalar_lea.hbm %s2, %s242
          %s244 = sshll.u32 %s236, 4
          %s245 = int_to_ptr.vmem [resolvable:$true] %s244
          %250 = dma.hbm_to_vmem [thread:$0]  %s243, 32, %s245, %s233, 16, 16, 1
        $region28: #{tpu_custom_call.1} parent=15 // pred_fallthru
          _
      $region16: #{tpu_custom_call.1} parent=5 // pred_fallthru
        _
      %p251 = scmp.le.s32.totalorder 1, %s18
      %p252 = scmp.lt.s32.totalorder %s18, 3
      %p253 = pnand %p251, %p252
      %p254 = pneg %p253
      // Predicated region
      $region29: #{tpu_custom_call.1} parent=5 // pred_check
        _
      $region30: #{tpu_custom_call.1} parent=5 // pred_check_branch
        %256 = sbr.rel (%p253) target = $region32
      $region31: #{tpu_custom_call.1} parent=5 // pred_region
        %s257 = ssub.s32 %s18, 1
        %s258 = sand.u32 %s61, 1
        %s259 = scalar_lea.sflag [#allocation3], %s258
        %s260 = sand.u32 %s61, 1
        %s261 = smul.addr %s260, 16
        %s262 = scalar_lea.vmem [#allocation2], %s261
        // Predicated region
        $region33: #{tpu_custom_call.1} parent=31 // pred_check
          %p263 = pneg %p74
        $region34: #{tpu_custom_call.1} parent=31 // pred_check_branch
          %265 = sbr.rel (%p263) target = $region36
        $region35: #{tpu_custom_call.1} parent=31 // pred_region
          %266 = dma.done %s259, 256
        $region36: #{tpu_custom_call.1} parent=31 // pred_fallthru
          _
        %s267 = sand.u32 %s23, 1
        %s268 = scalar_lea.sflag [#allocation6], %s267
        %s269 = sand.u32 %s91, 1
        %s270 = smul.addr %s269, 256
        %s271 = scalar_lea.vmem [#allocation5], %s270
        // Predicated region
        $region37: #{tpu_custom_call.1} parent=31 // pred_check
          %p272 = pneg %p104
        $region38: #{tpu_custom_call.1} parent=31 // pred_check_branch
          %274 = sbr.rel (%p272) target = $region40
        $region39: #{tpu_custom_call.1} parent=31 // pred_region
          %275 = dma.done %s268, 4096
        $region40: #{tpu_custom_call.1} parent=31 // pred_fallthru
          _
        %s276 = sand.u32 %s23, 1
        %s277 = scalar_lea.sflag [#allocation6], %s276
        %s278 = sand.u32 %s119, 1
        %s279 = smul.addr %s278, 2
        %s280 = scalar_lea.vmem [#allocation7], %s279
        // Predicated region
        $region41: #{tpu_custom_call.1} parent=31 // pred_check
          %p281 = pneg %p132
        $region42: #{tpu_custom_call.1} parent=31 // pred_check_branch
          %283 = sbr.rel (%p281) target = $region44
        $region43: #{tpu_custom_call.1} parent=31 // pred_region
          %284 = dma.done %s277, 32
        $region44: #{tpu_custom_call.1} parent=31 // pred_fallthru
          _
        %s285 = sand.u32 %s61, 1
        %s286 = scalar_lea.sflag [#allocation3], %s285
        %s287 = sand.u32 %s61, 1
        %s288 = smul.addr %s287, 16
        %s289 = scalar_lea.vmem [#allocation2], %s288
        %p290 = pneg %p74
        %p291 = pneg %p71
        %s292 = sand.u32 %s23, 1
        %s293 = scalar_lea.sflag [#allocation6], %s292
        %s294 = sand.u32 %s91, 1
        %s295 = smul.addr %s294, 256
        %s296 = scalar_lea.vmem [#allocation5], %s295
        %p297 = pneg %p104
        %p298 = pneg %p101
        %s299 = sand.u32 %s23, 1
        %s300 = scalar_lea.sflag [#allocation6], %s299
        %s301 = sand.u32 %s119, 1
        %s302 = smul.addr %s301, 2
        %s303 = scalar_lea.vmem [#allocation7], %s302
        %p304 = pneg %p132
        %p305 = pneg %p129
        %p306 = pneg %p162
        %p307 = pneg %p159
        %s308 = sand.u32 %s149, 1
        %s309 = scalar_lea.sflag [#allocation4], %s308
        %s310 = sand.u32 %s149, 1
        %s311 = smul.addr %s310, 16
        %s312 = scalar_lea.vmem [#allocation8], %s311
        %s313 = smul.u32 2, %s29
        %s314 = smul.u32 2, %s29
        %s315 = smul.u32 16, %s32
        %s316 = smul.u32 2, %s29
        %s317 = smul.u32 2, %s29
        %p318 = scmp.eq.s32.totalorder %s32, 0
        // Predicated region
        $region45: #{tpu_custom_call.1} parent=31 // pred_check
          %p319 = pneg %p318
        $region46: #{tpu_custom_call.1} parent=31 // pred_check_branch
          %321 = sbr.rel (%p319) target = $region48
        $region47: #{tpu_custom_call.1} parent=31 // pred_region
          %322 = vst [vmem:[%s312] sm:$0xff] 0.0
          %323 = vst [vmem:[%s312 + $0x8] sm:$0xff] 0.0
        $region48: #{tpu_custom_call.1} parent=31 // pred_fallthru
          _
        %v324 = vld [vmem:[%s312] sm:$0xff]
        %v325 = vld [vmem:[%s312 + $0x8] sm:$0xff]
        %v326 = vld [vmem:[%s262] sm:$0xff]
        %v327 = vld [vmem:[%s262 + $0x8] sm:$0xff]
        %v328 = vld [vmem:[%s271] sm:$0xff]
        %v329 = vld [vmem:[%s271 + $0x8] sm:$0xff]
        %v330 = vld [vmem:[%s271 + $0x10] sm:$0xff]
        %v331 = vld [vmem:[%s271 + $0x18] sm:$0xff]
        %v332 = vld [vmem:[%s271 + $0x20] sm:$0xff]
        %v333 = vld [vmem:[%s271 + $0x28] sm:$0xff]
        %v334 = vld [vmem:[%s271 + $0x30] sm:$0xff]
        %v335 = vld [vmem:[%s271 + $0x38] sm:$0xff]
        %v336 = vld [vmem:[%s271 + $0x40] sm:$0xff]
        %v337 = vld [vmem:[%s271 + $0x48] sm:$0xff]
        %v338 = vld [vmem:[%s271 + $0x50] sm:$0xff]
        %v339 = vld [vmem:[%s271 + $0x58] sm:$0xff]
        %v340 = vld [vmem:[%s271 + $0x60] sm:$0xff]
        %v341 = vld [vmem:[%s271 + $0x68] sm:$0xff]
        %v342 = vld [vmem:[%s271 + $0x70] sm:$0xff]
        %v343 = vld [vmem:[%s271 + $0x78] sm:$0xff]
        %v344 = vld [vmem:[%s271 + $0x80] sm:$0xff]
        %v345 = vld [vmem:[%s271 + $0x88] sm:$0xff]
        %v346 = vld [vmem:[%s271 + $0x90] sm:$0xff]
        %v347 = vld [vmem:[%s271 + $0x98] sm:$0xff]
        %v348 = vld [vmem:[%s271 + $0xa0] sm:$0xff]
        %v349 = vld [vmem:[%s271 + $0xa8] sm:$0xff]
        %v350 = vld [vmem:[%s271 + $0xb0] sm:$0xff]
        %v351 = vld [vmem:[%s271 + $0xb8] sm:$0xff]
        %v352 = vld [vmem:[%s271 + $0xc0] sm:$0xff]
        %v353 = vld [vmem:[%s271 + $0xc8] sm:$0xff]
        %v354 = vld [vmem:[%s271 + $0xd0] sm:$0xff]
        %v355 = vld [vmem:[%s271 + $0xd8] sm:$0xff]
        %v356 = vld [vmem:[%s271 + $0xe0] sm:$0xff]
        %v357 = vld [vmem:[%s271 + $0xe8] sm:$0xff]
        %v358 = vld [vmem:[%s271 + $0xf0] sm:$0xff]
        %v359 = vld [vmem:[%s271 + $0xf8] sm:$0xff]
        %360 = vmatprep.subr.mxu0 0.0
        %v361 = vand.u32 %v343, 4294901760
        %362 = vmatpush1.msra.mxu0 %v361
        %363 = vmatprep.subr.mxu0 0.0
        %v364 = vand.u32 %v342, 4294901760
        %365 = vmatpush1.msra.mxu0 %v364
        %366 = vmatprep.subr.mxu0 0.0
        %v367 = vand.u32 %v341, 4294901760
        %368 = vmatpush1.msra.mxu0 %v367
        %369 = vmatprep.subr.mxu0 0.0
        %v370 = vand.u32 %v340, 4294901760
        %371 = vmatpush1.msra.mxu0 %v370
        %372 = vmatprep.subr.mxu0 0.0
        %v373 = vand.u32 %v339, 4294901760
        %374 = vmatpush1.msra.mxu0 %v373
        %375 = vmatprep.subr.mxu0 0.0
        %v376 = vand.u32 %v338, 4294901760
        %377 = vmatpush1.msra.mxu0 %v376
        %378 = vmatprep.subr.mxu0 0.0
        %v379 = vand.u32 %v337, 4294901760
        %380 = vmatpush1.msra.mxu0 %v379
        %381 = vmatprep.subr.mxu0 0.0
        %v382 = vand.u32 %v336, 4294901760
        %383 = vmatpush1.msra.mxu0 %v382
        %384 = vmatprep.subr.mxu0 0.0
        %v385 = vand.u32 %v335, 4294901760
        %386 = vmatpush1.msra.mxu0 %v385
        %387 = vmatprep.subr.mxu0 0.0
        %v388 = vand.u32 %v334, 4294901760
        %389 = vmatpush1.msra.mxu0 %v388
        %390 = vmatprep.subr.mxu0 0.0
        %v391 = vand.u32 %v333, 4294901760
        %392 = vmatpush1.msra.mxu0 %v391
        %393 = vmatprep.subr.mxu0 0.0
        %v394 = vand.u32 %v332, 4294901760
        %395 = vmatpush1.msra.mxu0 %v394
        %396 = vmatprep.subr.mxu0 0.0
        %v397 = vand.u32 %v331, 4294901760
        %398 = vmatpush1.msra.mxu0 %v397
        %399 = vmatprep.subr.mxu0 0.0
        %v400 = vand.u32 %v330, 4294901760
        %401 = vmatpush1.msra.mxu0 %v400
        %402 = vmatprep.subr.mxu0 0.0
        %v403 = vand.u32 %v329, 4294901760
        %404 = vmatpush1.msra.mxu0 %v403
        %405 = vmatprep.subr.mxu0 0.0
        %v406 = vand.u32 %v328, 4294901760
        %407 = vmatpush1.msra.mxu0 %v406
        %408 = vmatprep.subr.mxu0 0.0
        %409 = vmatpush2.msra.mxu0 0.0
        %410 = vmatprep.subr.mxu0 0.0
        %411 = vmatpush2.msra.mxu0 0.0
        %412 = vmatprep.subr.mxu0 0.0
        %413 = vmatpush2.msra.mxu0 0.0
        %414 = vmatprep.subr.mxu0 0.0
        %415 = vmatpush2.msra.mxu0 0.0
        %416 = vmatprep.subr.mxu0 0.0
        %417 = vmatpush2.msra.mxu0 0.0
        %418 = vmatprep.subr.mxu0 0.0
        %419 = vmatpush2.msra.mxu0 0.0
        %420 = vmatprep.subr.mxu0 0.0
        %421 = vmatpush2.msra.mxu0 0.0
        %422 = vmatprep.subr.mxu0 0.0
        %423 = vmatpush2.msra.mxu0 0.0
        %424 = vmatprep.subr.mxu0 0.0
        %425 = vmatpush2.msra.mxu0 0.0
        %426 = vmatprep.subr.mxu0 0.0
        %427 = vmatpush2.msra.mxu0 0.0
        %428 = vmatprep.subr.mxu0 0.0
        %429 = vmatpush2.msra.mxu0 0.0
        %430 = vmatprep.subr.mxu0 0.0
        %431 = vmatpush2.msra.mxu0 0.0
        %432 = vmatprep.subr.mxu0 0.0
        %433 = vmatpush2.msra.mxu0 0.0
        %434 = vmatprep.subr.mxu0 0.0
        %435 = vmatpush2.msra.mxu0 0.0
        %436 = vmatprep.subr.mxu0 0.0
        %437 = vmatpush2.msra.mxu0 0.0
        %438 = vmatprep.subr.mxu0 0.0
        %439 = vmatpush2.msra.mxu0 0.0
        %440 = vmatprep.mubr.f32.mxu0 0.0
        %v441 = vand.u32 %v326, 4294901760
        %v442 = vsub.f32 %v326, %v441
        %v443 = vand.u32 %v442, 4294901760
        %v444 = vsub.f32 %v442, %v443
        %v445 = vand.u32 %v444, 4294901760
        %446 = vmatmul.mubr.f32.gmra.mxu0 %v445
        %v447 = vpop.f32.mrf.mxu0
        %v448 = vadd.f32 0.0, %v447
        %v449 = vpop.f32.mrf.mxu0
        %450 = vdwg.mxu0
        %451 = vmatprep.subr.mxu0 0.0
        %v452 = vand.u32 %v343, 4294901760
        %v453 = vsub.f32 %v343, %v452
        %v454 = vand.u32 %v453, 4294901760
        %v455 = vsub.f32 %v453, %v454
        %v456 = vand.u32 %v455, 4294901760
        %457 = vmatpush1.msra.mxu0 %v456
        %458 = vmatprep.subr.mxu0 0.0
        %v459 = vand.u32 %v342, 4294901760
        %v460 = vsub.f32 %v342, %v459
        %v461 = vand.u32 %v460, 4294901760
        %v462 = vsub.f32 %v460, %v461
        %v463 = vand.u32 %v462, 4294901760
        %464 = vmatpush1.msra.mxu0 %v463
        %465 = vmatprep.subr.mxu0 0.0
        %v466 = vand.u32 %v341, 4294901760
        %v467 = vsub.f32 %v341, %v466
        %v468 = vand.u32 %v467, 4294901760
        %v469 = vsub.f32 %v467, %v468
        %v470 = vand.u32 %v469, 4294901760
        %471 = vmatpush1.msra.mxu0 %v470
        %472 = vmatprep.subr.mxu0 0.0
        %v473 = vand.u32 %v340, 4294901760
        %v474 = vsub.f32 %v340, %v473
        %v475 = vand.u32 %v474, 4294901760
        %v476 = vsub.f32 %v474, %v475
        %v477 = vand.u32 %v476, 4294901760
        %478 = vmatpush1.msra.mxu0 %v477
        %479 = vmatprep.subr.mxu0 0.0
        %v480 = vand.u32 %v339, 4294901760
        %v481 = vsub.f32 %v339, %v480
        %v482 = vand.u32 %v481, 4294901760
        %v483 = vsub.f32 %v481, %v482
        %v484 = vand.u32 %v483, 4294901760
        %485 = vmatpush1.msra.mxu0 %v484
        %486 = vmatprep.subr.mxu0 0.0
        %v487 = vand.u32 %v338, 4294901760
        %v488 = vsub.f32 %v338, %v487
        %v489 = vand.u32 %v488, 4294901760
        %v490 = vsub.f32 %v488, %v489
        %v491 = vand.u32 %v490, 4294901760
        %492 = vmatpush1.msra.mxu0 %v491
        %493 = vmatprep.subr.mxu0 0.0
        %v494 = vand.u32 %v337, 4294901760
        %v495 = vsub.f32 %v337, %v494
        %v496 = vand.u32 %v495, 4294901760
        %v497 = vsub.f32 %v495, %v496
        %v498 = vand.u32 %v497, 4294901760
        %499 = vmatpush1.msra.mxu0 %v498
        %500 = vmatprep.subr.mxu0 0.0
        %v501 = vand.u32 %v336, 4294901760
        %v502 = vsub.f32 %v336, %v501
        %v503 = vand.u32 %v502, 4294901760
        %v504 = vsub.f32 %v502, %v503
        %v505 = vand.u32 %v504, 4294901760
        %506 = vmatpush1.msra.mxu0 %v505
        %507 = vmatprep.subr.mxu0 0.0
        %v508 = vand.u32 %v335, 4294901760
        %v509 = vsub.f32 %v335, %v508
        %v510 = vand.u32 %v509, 4294901760
        %v511 = vsub.f32 %v509, %v510
        %v512 = vand.u32 %v511, 4294901760
        %513 = vmatpush1.msra.mxu0 %v512
        %514 = vmatprep.subr.mxu0 0.0
        %v515 = vand.u32 %v334, 4294901760
        %v516 = vsub.f32 %v334, %v515
        %v517 = vand.u32 %v516, 4294901760
        %v518 = vsub.f32 %v516, %v517
        %v519 = vand.u32 %v518, 4294901760
        %520 = vmatpush1.msra.mxu0 %v519
        %521 = vmatprep.subr.mxu0 0.0
        %v522 = vand.u32 %v333, 4294901760
        %v523 = vsub.f32 %v333, %v522
        %v524 = vand.u32 %v523, 4294901760
        %v525 = vsub.f32 %v523, %v524
        %v526 = vand.u32 %v525, 4294901760
        %527 = vmatpush1.msra.mxu0 %v526
        %528 = vmatprep.subr.mxu0 0.0
        %v529 = vand.u32 %v332, 4294901760
        %v530 = vsub.f32 %v332, %v529
        %v531 = vand.u32 %v530, 4294901760
        %v532 = vsub.f32 %v530, %v531
        %v533 = vand.u32 %v532, 4294901760
        %534 = vmatpush1.msra.mxu0 %v533
        %535 = vmatprep.subr.mxu0 0.0
        %v536 = vand.u32 %v331, 4294901760
        %v537 = vsub.f32 %v331, %v536
        %v538 = vand.u32 %v537, 4294901760
        %v539 = vsub.f32 %v537, %v538
        %v540 = vand.u32 %v539, 4294901760
        %541 = vmatpush1.msra.mxu0 %v540
        %542 = vmatprep.subr.mxu0 0.0
        %v543 = vand.u32 %v330, 4294901760
        %v544 = vsub.f32 %v330, %v543
        %v545 = vand.u32 %v544, 4294901760
        %v546 = vsub.f32 %v544, %v545
        %v547 = vand.u32 %v546, 4294901760
        %548 = vmatpush1.msra.mxu0 %v547
        %549 = vmatprep.subr.mxu0 0.0
        %v550 = vand.u32 %v329, 4294901760
        %v551 = vsub.f32 %v329, %v550
        %v552 = vand.u32 %v551, 4294901760
        %v553 = vsub.f32 %v551, %v552
        %v554 = vand.u32 %v553, 4294901760
        %555 = vmatpush1.msra.mxu0 %v554
        %556 = vmatprep.subr.mxu0 0.0
        %v557 = vand.u32 %v328, 4294901760
        %v558 = vsub.f32 %v328, %v557
        %v559 = vand.u32 %v558, 4294901760
        %v560 = vsub.f32 %v558, %v559
        %v561 = vand.u32 %v560, 4294901760
        %562 = vmatpush1.msra.mxu0 %v561
        %563 = vmatprep.subr.mxu0 0.0
        %564 = vmatpush2.msra.mxu0 0.0
        %565 = vmatprep.subr.mxu0 0.0
        %566 = vmatpush2.msra.mxu0 0.0
        %567 = vmatprep.subr.mxu0 0.0
        %568 = vmatpush2.msra.mxu0 0.0
        %569 = vmatprep.subr.mxu0 0.0
        %570 = vmatpush2.msra.mxu0 0.0
        %571 = vmatprep.subr.mxu0 0.0
        %572 = vmatpush2.msra.mxu0 0.0
        %573 = vmatprep.subr.mxu0 0.0
        %574 = vmatpush2.msra.mxu0 0.0
        %575 = vmatprep.subr.mxu0 0.0
        %576 = vmatpush2.msra.mxu0 0.0
        %577 = vmatprep.subr.mxu0 0.0
        %578 = vmatpush2.msra.mxu0 0.0
        %579 = vmatprep.subr.mxu0 0.0
        %580 = vmatpush2.msra.mxu0 0.0
        %581 = vmatprep.subr.mxu0 0.0
        %582 = vmatpush2.msra.mxu0 0.0
        %583 = vmatprep.subr.mxu0 0.0
        %584 = vmatpush2.msra.mxu0 0.0
        %585 = vmatprep.subr.mxu0 0.0
        %586 = vmatpush2.msra.mxu0 0.0
        %587 = vmatprep.subr.mxu0 0.0
        %588 = vmatpush2.msra.mxu0 0.0
        %589 = vmatprep.subr.mxu0 0.0
        %590 = vmatpush2.msra.mxu0 0.0
        %591 = vmatprep.subr.mxu0 0.0
        %592 = vmatpush2.msra.mxu0 0.0
        %593 = vmatprep.subr.mxu0 0.0
        %594 = vmatpush2.msra.mxu0 0.0
        %595 = vmatprep.mubr.f32.mxu0 0.0
        %v596 = vand.u32 %v326, 4294901760
        %597 = vmatmul.mubr.f32.gmra.mxu0 %v596
        %v598 = vpop.f32.mrf.mxu0
        %v599 = vadd.f32 %v448, %v598
        %v600 = vpop.f32.mrf.mxu0
        %601 = vdwg.mxu0
        %602 = vmatprep.subr.mxu0 0.0
        %v603 = vand.u32 %v343, 4294901760
        %v604 = vsub.f32 %v343, %v603
        %605 = vmatpush1.msra.mxu0 %v604
        %606 = vmatprep.subr.mxu0 0.0
        %v607 = vand.u32 %v342, 4294901760
        %v608 = vsub.f32 %v342, %v607
        %609 = vmatpush1.msra.mxu0 %v608
        %610 = vmatprep.subr.mxu0 0.0
        %v611 = vand.u32 %v341, 4294901760
        %v612 = vsub.f32 %v341, %v611
        %613 = vmatpush1.msra.mxu0 %v612
        %614 = vmatprep.subr.mxu0 0.0
        %v615 = vand.u32 %v340, 4294901760
        %v616 = vsub.f32 %v340, %v615
        %617 = vmatpush1.msra.mxu0 %v616
        %618 = vmatprep.subr.mxu0 0.0
        %v619 = vand.u32 %v339, 4294901760
        %v620 = vsub.f32 %v339, %v619
        %621 = vmatpush1.msra.mxu0 %v620
        %622 = vmatprep.subr.mxu0 0.0
        %v623 = vand.u32 %v338, 4294901760
        %v624 = vsub.f32 %v338, %v623
        %625 = vmatpush1.msra.mxu0 %v624
        %626 = vmatprep.subr.mxu0 0.0
        %v627 = vand.u32 %v337, 4294901760
        %v628 = vsub.f32 %v337, %v627
        %629 = vmatpush1.msra.mxu0 %v628
        %630 = vmatprep.subr.mxu0 0.0
        %v631 = vand.u32 %v336, 4294901760
        %v632 = vsub.f32 %v336, %v631
        %633 = vmatpush1.msra.mxu0 %v632
        %634 = vmatprep.subr.mxu0 0.0
        %v635 = vand.u32 %v335, 4294901760
        %v636 = vsub.f32 %v335, %v635
        %637 = vmatpush1.msra.mxu0 %v636
        %638 = vmatprep.subr.mxu0 0.0
        %v639 = vand.u32 %v334, 4294901760
        %v640 = vsub.f32 %v334, %v639
        %641 = vmatpush1.msra.mxu0 %v640
        %642 = vmatprep.subr.mxu0 0.0
        %v643 = vand.u32 %v333, 4294901760
        %v644 = vsub.f32 %v333, %v643
        %645 = vmatpush1.msra.mxu0 %v644
        %646 = vmatprep.subr.mxu0 0.0
        %v647 = vand.u32 %v332, 4294901760
        %v648 = vsub.f32 %v332, %v647
        %649 = vmatpush1.msra.mxu0 %v648
        %650 = vmatprep.subr.mxu0 0.0
        %v651 = vand.u32 %v331, 4294901760
        %v652 = vsub.f32 %v331, %v651
        %653 = vmatpush1.msra.mxu0 %v652
        %654 = vmatprep.subr.mxu0 0.0
        %v655 = vand.u32 %v330, 4294901760
        %v656 = vsub.f32 %v330, %v655
        %657 = vmatpush1.msra.mxu0 %v656
        %658 = vmatprep.subr.mxu0 0.0
        %v659 = vand.u32 %v329, 4294901760
        %v660 = vsub.f32 %v329, %v659
        %661 = vmatpush1.msra.mxu0 %v660
        %662 = vmatprep.subr.mxu0 0.0
        %v663 = vand.u32 %v328, 4294901760
        %v664 = vsub.f32 %v328, %v663
        %665 = vmatpush1.msra.mxu0 %v664
        %666 = vmatprep.subr.mxu0 0.0
        %667 = vmatpush2.msra.mxu0 0.0
        %668 = vmatprep.subr.mxu0 0.0
        %669 = vmatpush2.msra.mxu0 0.0
        %670 = vmatprep.subr.mxu0 0.0
        %671 = vmatpush2.msra.mxu0 0.0
        %672 = vmatprep.subr.mxu0 0.0
        %673 = vmatpush2.msra.mxu0 0.0
        %674 = vmatprep.subr.mxu0 0.0
        %675 = vmatpush2.msra.mxu0 0.0
        %676 = vmatprep.subr.mxu0 0.0
        %677 = vmatpush2.msra.mxu0 0.0
        %678 = vmatprep.subr.mxu0 0.0
        %679 = vmatpush2.msra.mxu0 0.0
        %680 = vmatprep.subr.mxu0 0.0
        %681 = vmatpush2.msra.mxu0 0.0
        %682 = vmatprep.subr.mxu0 0.0
        %683 = vmatpush2.msra.mxu0 0.0
        %684 = vmatprep.subr.mxu0 0.0
        %685 = vmatpush2.msra.mxu0 0.0
        %686 = vmatprep.subr.mxu0 0.0
        %687 = vmatpush2.msra.mxu0 0.0
        %688 = vmatprep.subr.mxu0 0.0
        %689 = vmatpush2.msra.mxu0 0.0
        %690 = vmatprep.subr.mxu0 0.0
        %691 = vmatpush2.msra.mxu0 0.0
        %692 = vmatprep.subr.mxu0 0.0
        %693 = vmatpush2.msra.mxu0 0.0
        %694 = vmatprep.subr.mxu0 0.0
        %695 = vmatpush2.msra.mxu0 0.0
        %696 = vmatprep.subr.mxu0 0.0
        %697 = vmatpush2.msra.mxu0 0.0
        %698 = vmatprep.mubr.f32.mxu0 0.0
        %v699 = vand.u32 %v326, 4294901760
        %v700 = vsub.f32 %v326, %v699
        %701 = vmatmul.mubr.f32.gmra.mxu0 %v700
        %v702 = vpop.f32.mrf.mxu0
        %v703 = vadd.f32 %v599, %v702
        %v704 = vpop.f32.mrf.mxu0
        %705 = vdwg.mxu0
        %706 = vmatprep.subr.mxu0 0.0
        %v707 = vand.u32 %v343, 4294901760
        %708 = vmatpush1.msra.mxu0 %v707
        %709 = vmatprep.subr.mxu0 0.0
        %v710 = vand.u32 %v342, 4294901760
        %711 = vmatpush1.msra.mxu0 %v710
        %712 = vmatprep.subr.mxu0 0.0
        %v713 = vand.u32 %v341, 4294901760
        %714 = vmatpush1.msra.mxu0 %v713
        %715 = vmatprep.subr.mxu0 0.0
        %v716 = vand.u32 %v340, 4294901760
        %717 = vmatpush1.msra.mxu0 %v716
        %718 = vmatprep.subr.mxu0 0.0
        %v719 = vand.u32 %v339, 4294901760
        %720 = vmatpush1.msra.mxu0 %v719
        %721 = vmatprep.subr.mxu0 0.0
        %v722 = vand.u32 %v338, 4294901760
        %723 = vmatpush1.msra.mxu0 %v722
        %724 = vmatprep.subr.mxu0 0.0
        %v725 = vand.u32 %v337, 4294901760
        %726 = vmatpush1.msra.mxu0 %v725
        %727 = vmatprep.subr.mxu0 0.0
        %v728 = vand.u32 %v336, 4294901760
        %729 = vmatpush1.msra.mxu0 %v728
        %730 = vmatprep.subr.mxu0 0.0
        %v731 = vand.u32 %v335, 4294901760
        %732 = vmatpush1.msra.mxu0 %v731
        %733 = vmatprep.subr.mxu0 0.0
        %v734 = vand.u32 %v334, 4294901760
        %735 = vmatpush1.msra.mxu0 %v734
        %736 = vmatprep.subr.mxu0 0.0
        %v737 = vand.u32 %v333, 4294901760
        %738 = vmatpush1.msra.mxu0 %v737
        %739 = vmatprep.subr.mxu0 0.0
        %v740 = vand.u32 %v332, 4294901760
        %741 = vmatpush1.msra.mxu0 %v740
        %742 = vmatprep.subr.mxu0 0.0
        %v743 = vand.u32 %v331, 4294901760
        %744 = vmatpush1.msra.mxu0 %v743
        %745 = vmatprep.subr.mxu0 0.0
        %v746 = vand.u32 %v330, 4294901760
        %747 = vmatpush1.msra.mxu0 %v746
        %748 = vmatprep.subr.mxu0 0.0
        %v749 = vand.u32 %v329, 4294901760
        %750 = vmatpush1.msra.mxu0 %v749
        %751 = vmatprep.subr.mxu0 0.0
        %v752 = vand.u32 %v328, 4294901760
        %753 = vmatpush1.msra.mxu0 %v752
        %754 = vmatprep.subr.mxu0 0.0
        %755 = vmatpush2.msra.mxu0 0.0
        %756 = vmatprep.subr.mxu0 0.0
        %757 = vmatpush2.msra.mxu0 0.0
        %758 = vmatprep.subr.mxu0 0.0
        %759 = vmatpush2.msra.mxu0 0.0
        %760 = vmatprep.subr.mxu0 0.0
        %761 = vmatpush2.msra.mxu0 0.0
        %762 = vmatprep.subr.mxu0 0.0
        %763 = vmatpush2.msra.mxu0 0.0
        %764 = vmatprep.subr.mxu0 0.0
        %765 = vmatpush2.msra.mxu0 0.0
        %766 = vmatprep.subr.mxu0 0.0
        %767 = vmatpush2.msra.mxu0 0.0
        %768 = vmatprep.subr.mxu0 0.0
        %769 = vmatpush2.msra.mxu0 0.0
        %770 = vmatprep.subr.mxu0 0.0
        %771 = vmatpush2.msra.mxu0 0.0
        %772 = vmatprep.subr.mxu0 0.0
        %773 = vmatpush2.msra.mxu0 0.0
        %774 = vmatprep.subr.mxu0 0.0
        %775 = vmatpush2.msra.mxu0 0.0
        %776 = vmatprep.subr.mxu0 0.0
        %777 = vmatpush2.msra.mxu0 0.0
        %778 = vmatprep.subr.mxu0 0.0
        %779 = vmatpush2.msra.mxu0 0.0
        %780 = vmatprep.subr.mxu0 0.0
        %781 = vmatpush2.msra.mxu0 0.0
        %782 = vmatprep.subr.mxu0 0.0
        %783 = vmatpush2.msra.mxu0 0.0
        %784 = vmatprep.subr.mxu0 0.0
        %785 = vmatpush2.msra.mxu0 0.0
        %786 = vmatprep.mubr.f32.mxu0 0.0
        %v787 = vand.u32 %v326, 4294901760
        %v788 = vsub.f32 %v326, %v787
        %v789 = vand.u32 %v788, 4294901760
        %790 = vmatmul.mubr.f32.gmra.mxu0 %v789
        %v791 = vpop.f32.mrf.mxu0
        %v792 = vadd.f32 %v703, %v791
        %v793 = vpop.f32.mrf.mxu0
        %794 = vdwg.mxu0
        %795 = vmatprep.subr.mxu0 0.0
        %v796 = vand.u32 %v343, 4294901760
        %v797 = vsub.f32 %v343, %v796
        %v798 = vand.u32 %v797, 4294901760
        %799 = vmatpush1.msra.mxu0 %v798
        %800 = vmatprep.subr.mxu0 0.0
        %v801 = vand.u32 %v342, 4294901760
        %v802 = vsub.f32 %v342, %v801
        %v803 = vand.u32 %v802, 4294901760
        %804 = vmatpush1.msra.mxu0 %v803
        %805 = vmatprep.subr.mxu0 0.0
        %v806 = vand.u32 %v341, 4294901760
        %v807 = vsub.f32 %v341, %v806
        %v808 = vand.u32 %v807, 4294901760
        %809 = vmatpush1.msra.mxu0 %v808
        %810 = vmatprep.subr.mxu0 0.0
        %v811 = vand.u32 %v340, 4294901760
        %v812 = vsub.f32 %v340, %v811
        %v813 = vand.u32 %v812, 4294901760
        %814 = vmatpush1.msra.mxu0 %v813
        %815 = vmatprep.subr.mxu0 0.0
        %v816 = vand.u32 %v339, 4294901760
        %v817 = vsub.f32 %v339, %v816
        %v818 = vand.u32 %v817, 4294901760
        %819 = vmatpush1.msra.mxu0 %v818
        %820 = vmatprep.subr.mxu0 0.0
        %v821 = vand.u32 %v338, 4294901760
        %v822 = vsub.f32 %v338, %v821
        %v823 = vand.u32 %v822, 4294901760
        %824 = vmatpush1.msra.mxu0 %v823
        %825 = vmatprep.subr.mxu0 0.0
        %v826 = vand.u32 %v337, 4294901760
        %v827 = vsub.f32 %v337, %v826
        %v828 = vand.u32 %v827, 4294901760
        %829 = vmatpush1.msra.mxu0 %v828
        %830 = vmatprep.subr.mxu0 0.0
        %v831 = vand.u32 %v336, 4294901760
        %v832 = vsub.f32 %v336, %v831
        %v833 = vand.u32 %v832, 4294901760
        %834 = vmatpush1.msra.mxu0 %v833
        %835 = vmatprep.subr.mxu0 0.0
        %v836 = vand.u32 %v335, 4294901760
        %v837 = vsub.f32 %v335, %v836
        %v838 = vand.u32 %v837, 4294901760
        %839 = vmatpush1.msra.mxu0 %v838
        %840 = vmatprep.subr.mxu0 0.0
        %v841 = vand.u32 %v334, 4294901760
        %v842 = vsub.f32 %v334, %v841
        %v843 = vand.u32 %v842, 4294901760
        %844 = vmatpush1.msra.mxu0 %v843
        %845 = vmatprep.subr.mxu0 0.0
        %v846 = vand.u32 %v333, 4294901760
        %v847 = vsub.f32 %v333, %v846
        %v848 = vand.u32 %v847, 4294901760
        %849 = vmatpush1.msra.mxu0 %v848
        %850 = vmatprep.subr.mxu0 0.0
        %v851 = vand.u32 %v332, 4294901760
        %v852 = vsub.f32 %v332, %v851
        %v853 = vand.u32 %v852, 4294901760
        %854 = vmatpush1.msra.mxu0 %v853
        %855 = vmatprep.subr.mxu0 0.0
        %v856 = vand.u32 %v331, 4294901760
        %v857 = vsub.f32 %v331, %v856
        %v858 = vand.u32 %v857, 4294901760
        %859 = vmatpush1.msra.mxu0 %v858
        %860 = vmatprep.subr.mxu0 0.0
        %v861 = vand.u32 %v330, 4294901760
        %v862 = vsub.f32 %v330, %v861
        %v863 = vand.u32 %v862, 4294901760
        %864 = vmatpush1.msra.mxu0 %v863
        %865 = vmatprep.subr.mxu0 0.0
        %v866 = vand.u32 %v329, 4294901760
        %v867 = vsub.f32 %v329, %v866
        %v868 = vand.u32 %v867, 4294901760
        %869 = vmatpush1.msra.mxu0 %v868
        %870 = vmatprep.subr.mxu0 0.0
        %v871 = vand.u32 %v328, 4294901760
        %v872 = vsub.f32 %v328, %v871
        %v873 = vand.u32 %v872, 4294901760
        %874 = vmatpush1.msra.mxu0 %v873
        %875 = vmatprep.subr.mxu0 0.0
        %876 = vmatpush2.msra.mxu0 0.0
        %877 = vmatprep.subr.mxu0 0.0
        %878 = vmatpush2.msra.mxu0 0.0
        %879 = vmatprep.subr.mxu0 0.0
        %880 = vmatpush2.msra.mxu0 0.0
        %881 = vmatprep.subr.mxu0 0.0
        %882 = vmatpush2.msra.mxu0 0.0
        %883 = vmatprep.subr.mxu0 0.0
        %884 = vmatpush2.msra.mxu0 0.0
        %885 = vmatprep.subr.mxu0 0.0
        %886 = vmatpush2.msra.mxu0 0.0
        %887 = vmatprep.subr.mxu0 0.0
        %888 = vmatpush2.msra.mxu0 0.0
        %889 = vmatprep.subr.mxu0 0.0
        %890 = vmatpush2.msra.mxu0 0.0
        %891 = vmatprep.subr.mxu0 0.0
        %892 = vmatpush2.msra.mxu0 0.0
        %893 = vmatprep.subr.mxu0 0.0
        %894 = vmatpush2.msra.mxu0 0.0
        %895 = vmatprep.subr.mxu0 0.0
        %896 = vmatpush2.msra.mxu0 0.0
        %897 = vmatprep.subr.mxu0 0.0
        %898 = vmatpush2.msra.mxu0 0.0
        %899 = vmatprep.subr.mxu0 0.0
        %900 = vmatpush2.msra.mxu0 0.0
        %901 = vmatprep.subr.mxu0 0.0
        %902 = vmatpush2.msra.mxu0 0.0
        %903 = vmatprep.subr.mxu0 0.0
        %904 = vmatpush2.msra.mxu0 0.0
        %905 = vmatprep.subr.mxu0 0.0
        %906 = vmatpush2.msra.mxu0 0.0
        %907 = vmatprep.mubr.f32.mxu0 0.0
        %v908 = vand.u32 %v326, 4294901760
        %909 = vmatmul.mubr.f32.gmra.mxu0 %v908
        %v910 = vpop.f32.mrf.mxu0
        %v911 = vadd.f32 %v792, %v910
        %v912 = vpop.f32.mrf.mxu0
        %913 = vdwg.mxu0
        %914 = vmatprep.subr.mxu0 0.0
        %v915 = vand.u32 %v343, 4294901760
        %916 = vmatpush1.msra.mxu0 %v915
        %917 = vmatprep.subr.mxu0 0.0
        %v918 = vand.u32 %v342, 4294901760
        %919 = vmatpush1.msra.mxu0 %v918
        %920 = vmatprep.subr.mxu0 0.0
        %v921 = vand.u32 %v341, 4294901760
        %922 = vmatpush1.msra.mxu0 %v921
        %923 = vmatprep.subr.mxu0 0.0
        %v924 = vand.u32 %v340, 4294901760
        %925 = vmatpush1.msra.mxu0 %v924
        %926 = vmatprep.subr.mxu0 0.0
        %v927 = vand.u32 %v339, 4294901760
        %928 = vmatpush1.msra.mxu0 %v927
        %929 = vmatprep.subr.mxu0 0.0
        %v930 = vand.u32 %v338, 4294901760
        %931 = vmatpush1.msra.mxu0 %v930
        %932 = vmatprep.subr.mxu0 0.0
        %v933 = vand.u32 %v337, 4294901760
        %934 = vmatpush1.msra.mxu0 %v933
        %935 = vmatprep.subr.mxu0 0.0
        %v936 = vand.u32 %v336, 4294901760
        %937 = vmatpush1.msra.mxu0 %v936
        %938 = vmatprep.subr.mxu0 0.0
        %v939 = vand.u32 %v335, 4294901760
        %940 = vmatpush1.msra.mxu0 %v939
        %941 = vmatprep.subr.mxu0 0.0
        %v942 = vand.u32 %v334, 4294901760
        %943 = vmatpush1.msra.mxu0 %v942
        %944 = vmatprep.subr.mxu0 0.0
        %v945 = vand.u32 %v333, 4294901760
        %946 = vmatpush1.msra.mxu0 %v945
        %947 = vmatprep.subr.mxu0 0.0
        %v948 = vand.u32 %v332, 4294901760
        %949 = vmatpush1.msra.mxu0 %v948
        %950 = vmatprep.subr.mxu0 0.0
        %v951 = vand.u32 %v331, 4294901760
        %952 = vmatpush1.msra.mxu0 %v951
        %953 = vmatprep.subr.mxu0 0.0
        %v954 = vand.u32 %v330, 4294901760
        %955 = vmatpush1.msra.mxu0 %v954
        %956 = vmatprep.subr.mxu0 0.0
        %v957 = vand.u32 %v329, 4294901760
        %958 = vmatpush1.msra.mxu0 %v957
        %959 = vmatprep.subr.mxu0 0.0
        %v960 = vand.u32 %v328, 4294901760
        %961 = vmatpush1.msra.mxu0 %v960
        %962 = vmatprep.subr.mxu0 0.0
        %963 = vmatpush2.msra.mxu0 0.0
        %964 = vmatprep.subr.mxu0 0.0
        %965 = vmatpush2.msra.mxu0 0.0
        %966 = vmatprep.subr.mxu0 0.0
        %967 = vmatpush2.msra.mxu0 0.0
        %968 = vmatprep.subr.mxu0 0.0
        %969 = vmatpush2.msra.mxu0 0.0
        %970 = vmatprep.subr.mxu0 0.0
        %971 = vmatpush2.msra.mxu0 0.0
        %972 = vmatprep.subr.mxu0 0.0
        %973 = vmatpush2.msra.mxu0 0.0
        %974 = vmatprep.subr.mxu0 0.0
        %975 = vmatpush2.msra.mxu0 0.0
        %976 = vmatprep.subr.mxu0 0.0
        %977 = vmatpush2.msra.mxu0 0.0
        %978 = vmatprep.subr.mxu0 0.0
        %979 = vmatpush2.msra.mxu0 0.0
        %980 = vmatprep.subr.mxu0 0.0
        %981 = vmatpush2.msra.mxu0 0.0
        %982 = vmatprep.subr.mxu0 0.0
        %983 = vmatpush2.msra.mxu0 0.0
        %984 = vmatprep.subr.mxu0 0.0
        %985 = vmatpush2.msra.mxu0 0.0
        %986 = vmatprep.subr.mxu0 0.0
        %987 = vmatpush2.msra.mxu0 0.0
        %988 = vmatprep.subr.mxu0 0.0
        %989 = vmatpush2.msra.mxu0 0.0
        %990 = vmatprep.subr.mxu0 0.0
        %991 = vmatpush2.msra.mxu0 0.0
        %992 = vmatprep.subr.mxu0 0.0
        %993 = vmatpush2.msra.mxu0 0.0
        %994 = vmatprep.mubr.f32.mxu0 0.0
        %v995 = vand.u32 %v326, 4294901760
        %996 = vmatmul.mubr.f32.gmra.mxu0 %v995
        %v997 = vpop.f32.mrf.mxu0
        %v998 = vadd.f32 %v911, %v997
        %v999 = vpop.f32.mrf.mxu0
        %1000 = vdwg.mxu0
        %1001 = vmatprep.subr.mxu0 0.0
        %v1002 = vand.u32 %v359, 4294901760
        %1003 = vmatpush1.msra.mxu0 %v1002
        %1004 = vmatprep.subr.mxu0 0.0
        %v1005 = vand.u32 %v358, 4294901760
        %1006 = vmatpush1.msra.mxu0 %v1005
        %1007 = vmatprep.subr.mxu0 0.0
        %v1008 = vand.u32 %v357, 4294901760
        %1009 = vmatpush1.msra.mxu0 %v1008
        %1010 = vmatprep.subr.mxu0 0.0
        %v1011 = vand.u32 %v356, 4294901760
        %1012 = vmatpush1.msra.mxu0 %v1011
        %1013 = vmatprep.subr.mxu0 0.0
        %v1014 = vand.u32 %v355, 4294901760
        %1015 = vmatpush1.msra.mxu0 %v1014
        %1016 = vmatprep.subr.mxu0 0.0
        %v1017 = vand.u32 %v354, 4294901760
        %1018 = vmatpush1.msra.mxu0 %v1017
        %1019 = vmatprep.subr.mxu0 0.0
        %v1020 = vand.u32 %v353, 4294901760
        %1021 = vmatpush1.msra.mxu0 %v1020
        %1022 = vmatprep.subr.mxu0 0.0
        %v1023 = vand.u32 %v352, 4294901760
        %1024 = vmatpush1.msra.mxu0 %v1023
        %1025 = vmatprep.subr.mxu0 0.0
        %v1026 = vand.u32 %v351, 4294901760
        %1027 = vmatpush1.msra.mxu0 %v1026
        %1028 = vmatprep.subr.mxu0 0.0
        %v1029 = vand.u32 %v350, 4294901760
        %1030 = vmatpush1.msra.mxu0 %v1029
        %1031 = vmatprep.subr.mxu0 0.0
        %v1032 = vand.u32 %v349, 4294901760
        %1033 = vmatpush1.msra.mxu0 %v1032
        %1034 = vmatprep.subr.mxu0 0.0
        %v1035 = vand.u32 %v348, 4294901760
        %1036 = vmatpush1.msra.mxu0 %v1035
        %1037 = vmatprep.subr.mxu0 0.0
        %v1038 = vand.u32 %v347, 4294901760
        %1039 = vmatpush1.msra.mxu0 %v1038
        %1040 = vmatprep.subr.mxu0 0.0
        %v1041 = vand.u32 %v346, 4294901760
        %1042 = vmatpush1.msra.mxu0 %v1041
        %1043 = vmatprep.subr.mxu0 0.0
        %v1044 = vand.u32 %v345, 4294901760
        %1045 = vmatpush1.msra.mxu0 %v1044
        %1046 = vmatprep.subr.mxu0 0.0
        %v1047 = vand.u32 %v344, 4294901760
        %1048 = vmatpush1.msra.mxu0 %v1047
        %1049 = vmatprep.subr.mxu0 0.0
        %1050 = vmatpush2.msra.mxu0 0.0
        %1051 = vmatprep.subr.mxu0 0.0
        %1052 = vmatpush2.msra.mxu0 0.0
        %1053 = vmatprep.subr.mxu0 0.0
        %1054 = vmatpush2.msra.mxu0 0.0
        %1055 = vmatprep.subr.mxu0 0.0
        %1056 = vmatpush2.msra.mxu0 0.0
        %1057 = vmatprep.subr.mxu0 0.0
        %1058 = vmatpush2.msra.mxu0 0.0
        %1059 = vmatprep.subr.mxu0 0.0
        %1060 = vmatpush2.msra.mxu0 0.0
        %1061 = vmatprep.subr.mxu0 0.0
        %1062 = vmatpush2.msra.mxu0 0.0
        %1063 = vmatprep.subr.mxu0 0.0
        %1064 = vmatpush2.msra.mxu0 0.0
        %1065 = vmatprep.subr.mxu0 0.0
        %1066 = vmatpush2.msra.mxu0 0.0
        %1067 = vmatprep.subr.mxu0 0.0
        %1068 = vmatpush2.msra.mxu0 0.0
        %1069 = vmatprep.subr.mxu0 0.0
        %1070 = vmatpush2.msra.mxu0 0.0
        %1071 = vmatprep.subr.mxu0 0.0
        %1072 = vmatpush2.msra.mxu0 0.0
        %1073 = vmatprep.subr.mxu0 0.0
        %1074 = vmatpush2.msra.mxu0 0.0
        %1075 = vmatprep.subr.mxu0 0.0
        %1076 = vmatpush2.msra.mxu0 0.0
        %1077 = vmatprep.subr.mxu0 0.0
        %1078 = vmatpush2.msra.mxu0 0.0
        %1079 = vmatprep.subr.mxu0 0.0
        %1080 = vmatpush2.msra.mxu0 0.0
        %1081 = vmatprep.mubr.f32.mxu0 0.0
        %v1082 = vand.u32 %v327, 4294901760
        %v1083 = vsub.f32 %v327, %v1082
        %v1084 = vand.u32 %v1083, 4294901760
        %v1085 = vsub.f32 %v1083, %v1084
        %v1086 = vand.u32 %v1085, 4294901760
        %1087 = vmatmul.mubr.f32.gmra.mxu0 %v1086
        %v1088 = vpop.f32.mrf.mxu0
        %v1089 = vadd.f32 0.0, %v1088
        %v1090 = vpop.f32.mrf.mxu0
        %1091 = vdwg.mxu0
        %1092 = vmatprep.subr.mxu0 0.0
        %v1093 = vand.u32 %v359, 4294901760
        %v1094 = vsub.f32 %v359, %v1093
        %v1095 = vand.u32 %v1094, 4294901760
        %v1096 = vsub.f32 %v1094, %v1095
        %v1097 = vand.u32 %v1096, 4294901760
        %1098 = vmatpush1.msra.mxu0 %v1097
        %1099 = vmatprep.subr.mxu0 0.0
        %v1100 = vand.u32 %v358, 4294901760
        %v1101 = vsub.f32 %v358, %v1100
        %v1102 = vand.u32 %v1101, 4294901760
        %v1103 = vsub.f32 %v1101, %v1102
        %v1104 = vand.u32 %v1103, 4294901760
        %1105 = vmatpush1.msra.mxu0 %v1104
        %1106 = vmatprep.subr.mxu0 0.0
        %v1107 = vand.u32 %v357, 4294901760
        %v1108 = vsub.f32 %v357, %v1107
        %v1109 = vand.u32 %v1108, 4294901760
        %v1110 = vsub.f32 %v1108, %v1109
        %v1111 = vand.u32 %v1110, 4294901760
        %1112 = vmatpush1.msra.mxu0 %v1111
        %1113 = vmatprep.subr.mxu0 0.0
        %v1114 = vand.u32 %v356, 4294901760
        %v1115 = vsub.f32 %v356, %v1114
        %v1116 = vand.u32 %v1115, 4294901760
        %v1117 = vsub.f32 %v1115, %v1116
        %v1118 = vand.u32 %v1117, 4294901760
        %1119 = vmatpush1.msra.mxu0 %v1118
        %1120 = vmatprep.subr.mxu0 0.0
        %v1121 = vand.u32 %v355, 4294901760
        %v1122 = vsub.f32 %v355, %v1121
        %v1123 = vand.u32 %v1122, 4294901760
        %v1124 = vsub.f32 %v1122, %v1123
        %v1125 = vand.u32 %v1124, 4294901760
        %1126 = vmatpush1.msra.mxu0 %v1125
        %1127 = vmatprep.subr.mxu0 0.0
        %v1128 = vand.u32 %v354, 4294901760
        %v1129 = vsub.f32 %v354, %v1128
        %v1130 = vand.u32 %v1129, 4294901760
        %v1131 = vsub.f32 %v1129, %v1130
        %v1132 = vand.u32 %v1131, 4294901760
        %1133 = vmatpush1.msra.mxu0 %v1132
        %1134 = vmatprep.subr.mxu0 0.0
        %v1135 = vand.u32 %v353, 4294901760
        %v1136 = vsub.f32 %v353, %v1135
        %v1137 = vand.u32 %v1136, 4294901760
        %v1138 = vsub.f32 %v1136, %v1137
        %v1139 = vand.u32 %v1138, 4294901760
        %1140 = vmatpush1.msra.mxu0 %v1139
        %1141 = vmatprep.subr.mxu0 0.0
        %v1142 = vand.u32 %v352, 4294901760
        %v1143 = vsub.f32 %v352, %v1142
        %v1144 = vand.u32 %v1143, 4294901760
        %v1145 = vsub.f32 %v1143, %v1144
        %v1146 = vand.u32 %v1145, 4294901760
        %1147 = vmatpush1.msra.mxu0 %v1146
        %1148 = vmatprep.subr.mxu0 0.0
        %v1149 = vand.u32 %v351, 4294901760
        %v1150 = vsub.f32 %v351, %v1149
        %v1151 = vand.u32 %v1150, 4294901760
        %v1152 = vsub.f32 %v1150, %v1151
        %v1153 = vand.u32 %v1152, 4294901760
        %1154 = vmatpush1.msra.mxu0 %v1153
        %1155 = vmatprep.subr.mxu0 0.0
        %v1156 = vand.u32 %v350, 4294901760
        %v1157 = vsub.f32 %v350, %v1156
        %v1158 = vand.u32 %v1157, 4294901760
        %v1159 = vsub.f32 %v1157, %v1158
        %v1160 = vand.u32 %v1159, 4294901760
        %1161 = vmatpush1.msra.mxu0 %v1160
        %1162 = vmatprep.subr.mxu0 0.0
        %v1163 = vand.u32 %v349, 4294901760
        %v1164 = vsub.f32 %v349, %v1163
        %v1165 = vand.u32 %v1164, 4294901760
        %v1166 = vsub.f32 %v1164, %v1165
        %v1167 = vand.u32 %v1166, 4294901760
        %1168 = vmatpush1.msra.mxu0 %v1167
        %1169 = vmatprep.subr.mxu0 0.0
        %v1170 = vand.u32 %v348, 4294901760
        %v1171 = vsub.f32 %v348, %v1170
        %v1172 = vand.u32 %v1171, 4294901760
        %v1173 = vsub.f32 %v1171, %v1172
        %v1174 = vand.u32 %v1173, 4294901760
        %1175 = vmatpush1.msra.mxu0 %v1174
        %1176 = vmatprep.subr.mxu0 0.0
        %v1177 = vand.u32 %v347, 4294901760
        %v1178 = vsub.f32 %v347, %v1177
        %v1179 = vand.u32 %v1178, 4294901760
        %v1180 = vsub.f32 %v1178, %v1179
        %v1181 = vand.u32 %v1180, 4294901760
        %1182 = vmatpush1.msra.mxu0 %v1181
        %1183 = vmatprep.subr.mxu0 0.0
        %v1184 = vand.u32 %v346, 4294901760
        %v1185 = vsub.f32 %v346, %v1184
        %v1186 = vand.u32 %v1185, 4294901760
        %v1187 = vsub.f32 %v1185, %v1186
        %v1188 = vand.u32 %v1187, 4294901760
        %1189 = vmatpush1.msra.mxu0 %v1188
        %1190 = vmatprep.subr.mxu0 0.0
        %v1191 = vand.u32 %v345, 4294901760
        %v1192 = vsub.f32 %v345, %v1191
        %v1193 = vand.u32 %v1192, 4294901760
        %v1194 = vsub.f32 %v1192, %v1193
        %v1195 = vand.u32 %v1194, 4294901760
        %1196 = vmatpush1.msra.mxu0 %v1195
        %1197 = vmatprep.subr.mxu0 0.0
        %v1198 = vand.u32 %v344, 4294901760
        %v1199 = vsub.f32 %v344, %v1198
        %v1200 = vand.u32 %v1199, 4294901760
        %v1201 = vsub.f32 %v1199, %v1200
        %v1202 = vand.u32 %v1201, 4294901760
        %1203 = vmatpush1.msra.mxu0 %v1202
        %1204 = vmatprep.subr.mxu0 0.0
        %1205 = vmatpush2.msra.mxu0 0.0
        %1206 = vmatprep.subr.mxu0 0.0
        %1207 = vmatpush2.msra.mxu0 0.0
        %1208 = vmatprep.subr.mxu0 0.0
        %1209 = vmatpush2.msra.mxu0 0.0
        %1210 = vmatprep.subr.mxu0 0.0
        %1211 = vmatpush2.msra.mxu0 0.0
        %1212 = vmatprep.subr.mxu0 0.0
        %1213 = vmatpush2.msra.mxu0 0.0
        %1214 = vmatprep.subr.mxu0 0.0
        %1215 = vmatpush2.msra.mxu0 0.0
        %1216 = vmatprep.subr.mxu0 0.0
        %1217 = vmatpush2.msra.mxu0 0.0
        %1218 = vmatprep.subr.mxu0 0.0
        %1219 = vmatpush2.msra.mxu0 0.0
        %1220 = vmatprep.subr.mxu0 0.0
        %1221 = vmatpush2.msra.mxu0 0.0
        %1222 = vmatprep.subr.mxu0 0.0
        %1223 = vmatpush2.msra.mxu0 0.0
        %1224 = vmatprep.subr.mxu0 0.0
        %1225 = vmatpush2.msra.mxu0 0.0
        %1226 = vmatprep.subr.mxu0 0.0
        %1227 = vmatpush2.msra.mxu0 0.0
        %1228 = vmatprep.subr.mxu0 0.0
        %1229 = vmatpush2.msra.mxu0 0.0
        %1230 = vmatprep.subr.mxu0 0.0
        %1231 = vmatpush2.msra.mxu0 0.0
        %1232 = vmatprep.subr.mxu0 0.0
        %1233 = vmatpush2.msra.mxu0 0.0
        %1234 = vmatprep.subr.mxu0 0.0
        %1235 = vmatpush2.msra.mxu0 0.0
        %1236 = vmatprep.mubr.f32.mxu0 0.0
        %v1237 = vand.u32 %v327, 4294901760
        %1238 = vmatmul.mubr.f32.gmra.mxu0 %v1237
        %v1239 = vpop.f32.mrf.mxu0
        %v1240 = vadd.f32 %v1089, %v1239
        %v1241 = vpop.f32.mrf.mxu0
        %1242 = vdwg.mxu0
        %1243 = vmatprep.subr.mxu0 0.0
        %v1244 = vand.u32 %v359, 4294901760
        %v1245 = vsub.f32 %v359, %v1244
        %1246 = vmatpush1.msra.mxu0 %v1245
        %1247 = vmatprep.subr.mxu0 0.0
        %v1248 = vand.u32 %v358, 4294901760
        %v1249 = vsub.f32 %v358, %v1248
        %1250 = vmatpush1.msra.mxu0 %v1249
        %1251 = vmatprep.subr.mxu0 0.0
        %v1252 = vand.u32 %v357, 4294901760
        %v1253 = vsub.f32 %v357, %v1252
        %1254 = vmatpush1.msra.mxu0 %v1253
        %1255 = vmatprep.subr.mxu0 0.0
        %v1256 = vand.u32 %v356, 4294901760
        %v1257 = vsub.f32 %v356, %v1256
        %1258 = vmatpush1.msra.mxu0 %v1257
        %1259 = vmatprep.subr.mxu0 0.0
        %v1260 = vand.u32 %v355, 4294901760
        %v1261 = vsub.f32 %v355, %v1260
        %1262 = vmatpush1.msra.mxu0 %v1261
        %1263 = vmatprep.subr.mxu0 0.0
        %v1264 = vand.u32 %v354, 4294901760
        %v1265 = vsub.f32 %v354, %v1264
        %1266 = vmatpush1.msra.mxu0 %v1265
        %1267 = vmatprep.subr.mxu0 0.0
        %v1268 = vand.u32 %v353, 4294901760
        %v1269 = vsub.f32 %v353, %v1268
        %1270 = vmatpush1.msra.mxu0 %v1269
        %1271 = vmatprep.subr.mxu0 0.0
        %v1272 = vand.u32 %v352, 4294901760
        %v1273 = vsub.f32 %v352, %v1272
        %1274 = vmatpush1.msra.mxu0 %v1273
        %1275 = vmatprep.subr.mxu0 0.0
        %v1276 = vand.u32 %v351, 4294901760
        %v1277 = vsub.f32 %v351, %v1276
        %1278 = vmatpush1.msra.mxu0 %v1277
        %1279 = vmatprep.subr.mxu0 0.0
        %v1280 = vand.u32 %v350, 4294901760
        %v1281 = vsub.f32 %v350, %v1280
        %1282 = vmatpush1.msra.mxu0 %v1281
        %1283 = vmatprep.subr.mxu0 0.0
        %v1284 = vand.u32 %v349, 4294901760
        %v1285 = vsub.f32 %v349, %v1284
        %1286 = vmatpush1.msra.mxu0 %v1285
        %1287 = vmatprep.subr.mxu0 0.0
        %v1288 = vand.u32 %v348, 4294901760
        %v1289 = vsub.f32 %v348, %v1288
        %1290 = vmatpush1.msra.mxu0 %v1289
        %1291 = vmatprep.subr.mxu0 0.0
        %v1292 = vand.u32 %v347, 4294901760
        %v1293 = vsub.f32 %v347, %v1292
        %1294 = vmatpush1.msra.mxu0 %v1293
        %1295 = vmatprep.subr.mxu0 0.0
        %v1296 = vand.u32 %v346, 4294901760
        %v1297 = vsub.f32 %v346, %v1296
        %1298 = vmatpush1.msra.mxu0 %v1297
        %1299 = vmatprep.subr.mxu0 0.0
        %v1300 = vand.u32 %v345, 4294901760
        %v1301 = vsub.f32 %v345, %v1300
        %1302 = vmatpush1.msra.mxu0 %v1301
        %1303 = vmatprep.subr.mxu0 0.0
        %v1304 = vand.u32 %v344, 4294901760
        %v1305 = vsub.f32 %v344, %v1304
        %1306 = vmatpush1.msra.mxu0 %v1305
        %1307 = vmatprep.subr.mxu0 0.0
        %1308 = vmatpush2.msra.mxu0 0.0
        %1309 = vmatprep.subr.mxu0 0.0
        %1310 = vmatpush2.msra.mxu0 0.0
        %1311 = vmatprep.subr.mxu0 0.0
        %1312 = vmatpush2.msra.mxu0 0.0
        %1313 = vmatprep.subr.mxu0 0.0
        %1314 = vmatpush2.msra.mxu0 0.0
        %1315 = vmatprep.subr.mxu0 0.0
        %1316 = vmatpush2.msra.mxu0 0.0
        %1317 = vmatprep.subr.mxu0 0.0
        %1318 = vmatpush2.msra.mxu0 0.0
        %1319 = vmatprep.subr.mxu0 0.0
        %1320 = vmatpush2.msra.mxu0 0.0
        %1321 = vmatprep.subr.mxu0 0.0
        %1322 = vmatpush2.msra.mxu0 0.0
        %1323 = vmatprep.subr.mxu0 0.0
        %1324 = vmatpush2.msra.mxu0 0.0
        %1325 = vmatprep.subr.mxu0 0.0
        %1326 = vmatpush2.msra.mxu0 0.0
        %1327 = vmatprep.subr.mxu0 0.0
        %1328 = vmatpush2.msra.mxu0 0.0
        %1329 = vmatprep.subr.mxu0 0.0
        %1330 = vmatpush2.msra.mxu0 0.0
        %1331 = vmatprep.subr.mxu0 0.0
        %1332 = vmatpush2.msra.mxu0 0.0
        %1333 = vmatprep.subr.mxu0 0.0
        %1334 = vmatpush2.msra.mxu0 0.0
        %1335 = vmatprep.subr.mxu0 0.0
        %1336 = vmatpush2.msra.mxu0 0.0
        %1337 = vmatprep.subr.mxu0 0.0
        %1338 = vmatpush2.msra.mxu0 0.0
        %1339 = vmatprep.mubr.f32.mxu0 0.0
        %v1340 = vand.u32 %v327, 4294901760
        %v1341 = vsub.f32 %v327, %v1340
        %1342 = vmatmul.mubr.f32.gmra.mxu0 %v1341
        %v1343 = vpop.f32.mrf.mxu0
        %v1344 = vadd.f32 %v1240, %v1343
        %v1345 = vpop.f32.mrf.mxu0
        %1346 = vdwg.mxu0
        %1347 = vmatprep.subr.mxu0 0.0
        %v1348 = vand.u32 %v359, 4294901760
        %1349 = vmatpush1.msra.mxu0 %v1348
        %1350 = vmatprep.subr.mxu0 0.0
        %v1351 = vand.u32 %v358, 4294901760
        %1352 = vmatpush1.msra.mxu0 %v1351
        %1353 = vmatprep.subr.mxu0 0.0
        %v1354 = vand.u32 %v357, 4294901760
        %1355 = vmatpush1.msra.mxu0 %v1354
        %1356 = vmatprep.subr.mxu0 0.0
        %v1357 = vand.u32 %v356, 4294901760
        %1358 = vmatpush1.msra.mxu0 %v1357
        %1359 = vmatprep.subr.mxu0 0.0
        %v1360 = vand.u32 %v355, 4294901760
        %1361 = vmatpush1.msra.mxu0 %v1360
        %1362 = vmatprep.subr.mxu0 0.0
        %v1363 = vand.u32 %v354, 4294901760
        %1364 = vmatpush1.msra.mxu0 %v1363
        %1365 = vmatprep.subr.mxu0 0.0
        %v1366 = vand.u32 %v353, 4294901760
        %1367 = vmatpush1.msra.mxu0 %v1366
        %1368 = vmatprep.subr.mxu0 0.0
        %v1369 = vand.u32 %v352, 4294901760
        %1370 = vmatpush1.msra.mxu0 %v1369
        %1371 = vmatprep.subr.mxu0 0.0
        %v1372 = vand.u32 %v351, 4294901760
        %1373 = vmatpush1.msra.mxu0 %v1372
        %1374 = vmatprep.subr.mxu0 0.0
        %v1375 = vand.u32 %v350, 4294901760
        %1376 = vmatpush1.msra.mxu0 %v1375
        %1377 = vmatprep.subr.mxu0 0.0
        %v1378 = vand.u32 %v349, 4294901760
        %1379 = vmatpush1.msra.mxu0 %v1378
        %1380 = vmatprep.subr.mxu0 0.0
        %v1381 = vand.u32 %v348, 4294901760
        %1382 = vmatpush1.msra.mxu0 %v1381
        %1383 = vmatprep.subr.mxu0 0.0
        %v1384 = vand.u32 %v347, 4294901760
        %1385 = vmatpush1.msra.mxu0 %v1384
        %1386 = vmatprep.subr.mxu0 0.0
        %v1387 = vand.u32 %v346, 4294901760
        %1388 = vmatpush1.msra.mxu0 %v1387
        %1389 = vmatprep.subr.mxu0 0.0
        %v1390 = vand.u32 %v345, 4294901760
        %1391 = vmatpush1.msra.mxu0 %v1390
        %1392 = vmatprep.subr.mxu0 0.0
        %v1393 = vand.u32 %v344, 4294901760
        %1394 = vmatpush1.msra.mxu0 %v1393
        %1395 = vmatprep.subr.mxu0 0.0
        %1396 = vmatpush2.msra.mxu0 0.0
        %1397 = vmatprep.subr.mxu0 0.0
        %1398 = vmatpush2.msra.mxu0 0.0
        %1399 = vmatprep.subr.mxu0 0.0
        %1400 = vmatpush2.msra.mxu0 0.0
        %1401 = vmatprep.subr.mxu0 0.0
        %1402 = vmatpush2.msra.mxu0 0.0
        %1403 = vmatprep.subr.mxu0 0.0
        %1404 = vmatpush2.msra.mxu0 0.0
        %1405 = vmatprep.subr.mxu0 0.0
        %1406 = vmatpush2.msra.mxu0 0.0
        %1407 = vmatprep.subr.mxu0 0.0
        %1408 = vmatpush2.msra.mxu0 0.0
        %1409 = vmatprep.subr.mxu0 0.0
        %1410 = vmatpush2.msra.mxu0 0.0
        %1411 = vmatprep.subr.mxu0 0.0
        %1412 = vmatpush2.msra.mxu0 0.0
        %1413 = vmatprep.subr.mxu0 0.0
        %1414 = vmatpush2.msra.mxu0 0.0
        %1415 = vmatprep.subr.mxu0 0.0
        %1416 = vmatpush2.msra.mxu0 0.0
        %1417 = vmatprep.subr.mxu0 0.0
        %1418 = vmatpush2.msra.mxu0 0.0
        %1419 = vmatprep.subr.mxu0 0.0
        %1420 = vmatpush2.msra.mxu0 0.0
        %1421 = vmatprep.subr.mxu0 0.0
        %1422 = vmatpush2.msra.mxu0 0.0
        %1423 = vmatprep.subr.mxu0 0.0
        %1424 = vmatpush2.msra.mxu0 0.0
        %1425 = vmatprep.subr.mxu0 0.0
        %1426 = vmatpush2.msra.mxu0 0.0
        %1427 = vmatprep.mubr.f32.mxu0 0.0
        %v1428 = vand.u32 %v327, 4294901760
        %v1429 = vsub.f32 %v327, %v1428
        %v1430 = vand.u32 %v1429, 4294901760
        %1431 = vmatmul.mubr.f32.gmra.mxu0 %v1430
        %v1432 = vpop.f32.mrf.mxu0
        %v1433 = vadd.f32 %v1344, %v1432
        %v1434 = vpop.f32.mrf.mxu0
        %1435 = vdwg.mxu0
        %1436 = vmatprep.subr.mxu0 0.0
        %v1437 = vand.u32 %v359, 4294901760
        %v1438 = vsub.f32 %v359, %v1437
        %v1439 = vand.u32 %v1438, 4294901760
        %1440 = vmatpush1.msra.mxu0 %v1439
        %1441 = vmatprep.subr.mxu0 0.0
        %v1442 = vand.u32 %v358, 4294901760
        %v1443 = vsub.f32 %v358, %v1442
        %v1444 = vand.u32 %v1443, 4294901760
        %1445 = vmatpush1.msra.mxu0 %v1444
        %1446 = vmatprep.subr.mxu0 0.0
        %v1447 = vand.u32 %v357, 4294901760
        %v1448 = vsub.f32 %v357, %v1447
        %v1449 = vand.u32 %v1448, 4294901760
        %1450 = vmatpush1.msra.mxu0 %v1449
        %1451 = vmatprep.subr.mxu0 0.0
        %v1452 = vand.u32 %v356, 4294901760
        %v1453 = vsub.f32 %v356, %v1452
        %v1454 = vand.u32 %v1453, 4294901760
        %1455 = vmatpush1.msra.mxu0 %v1454
        %1456 = vmatprep.subr.mxu0 0.0
        %v1457 = vand.u32 %v355, 4294901760
        %v1458 = vsub.f32 %v355, %v1457
        %v1459 = vand.u32 %v1458, 4294901760
        %1460 = vmatpush1.msra.mxu0 %v1459
        %1461 = vmatprep.subr.mxu0 0.0
        %v1462 = vand.u32 %v354, 4294901760
        %v1463 = vsub.f32 %v354, %v1462
        %v1464 = vand.u32 %v1463, 4294901760
        %1465 = vmatpush1.msra.mxu0 %v1464
        %1466 = vmatprep.subr.mxu0 0.0
        %v1467 = vand.u32 %v353, 4294901760
        %v1468 = vsub.f32 %v353, %v1467
        %v1469 = vand.u32 %v1468, 4294901760
        %1470 = vmatpush1.msra.mxu0 %v1469
        %1471 = vmatprep.subr.mxu0 0.0
        %v1472 = vand.u32 %v352, 4294901760
        %v1473 = vsub.f32 %v352, %v1472
        %v1474 = vand.u32 %v1473, 4294901760
        %1475 = vmatpush1.msra.mxu0 %v1474
        %1476 = vmatprep.subr.mxu0 0.0
        %v1477 = vand.u32 %v351, 4294901760
        %v1478 = vsub.f32 %v351, %v1477
        %v1479 = vand.u32 %v1478, 4294901760
        %1480 = vmatpush1.msra.mxu0 %v1479
        %1481 = vmatprep.subr.mxu0 0.0
        %v1482 = vand.u32 %v350, 4294901760
        %v1483 = vsub.f32 %v350, %v1482
        %v1484 = vand.u32 %v1483, 4294901760
        %1485 = vmatpush1.msra.mxu0 %v1484
        %1486 = vmatprep.subr.mxu0 0.0
        %v1487 = vand.u32 %v349, 4294901760
        %v1488 = vsub.f32 %v349, %v1487
        %v1489 = vand.u32 %v1488, 4294901760
        %1490 = vmatpush1.msra.mxu0 %v1489
        %1491 = vmatprep.subr.mxu0 0.0
        %v1492 = vand.u32 %v348, 4294901760
        %v1493 = vsub.f32 %v348, %v1492
        %v1494 = vand.u32 %v1493, 4294901760
        %1495 = vmatpush1.msra.mxu0 %v1494
        %1496 = vmatprep.subr.mxu0 0.0
        %v1497 = vand.u32 %v347, 4294901760
        %v1498 = vsub.f32 %v347, %v1497
        %v1499 = vand.u32 %v1498, 4294901760
        %1500 = vmatpush1.msra.mxu0 %v1499
        %1501 = vmatprep.subr.mxu0 0.0
        %v1502 = vand.u32 %v346, 4294901760
        %v1503 = vsub.f32 %v346, %v1502
        %v1504 = vand.u32 %v1503, 4294901760
        %1505 = vmatpush1.msra.mxu0 %v1504
        %1506 = vmatprep.subr.mxu0 0.0
        %v1507 = vand.u32 %v345, 4294901760
        %v1508 = vsub.f32 %v345, %v1507
        %v1509 = vand.u32 %v1508, 4294901760
        %1510 = vmatpush1.msra.mxu0 %v1509
        %1511 = vmatprep.subr.mxu0 0.0
        %v1512 = vand.u32 %v344, 4294901760
        %v1513 = vsub.f32 %v344, %v1512
        %v1514 = vand.u32 %v1513, 4294901760
        %1515 = vmatpush1.msra.mxu0 %v1514
        %1516 = vmatprep.subr.mxu0 0.0
        %1517 = vmatpush2.msra.mxu0 0.0
        %1518 = vmatprep.subr.mxu0 0.0
        %1519 = vmatpush2.msra.mxu0 0.0
        %1520 = vmatprep.subr.mxu0 0.0
        %1521 = vmatpush2.msra.mxu0 0.0
        %1522 = vmatprep.subr.mxu0 0.0
        %1523 = vmatpush2.msra.mxu0 0.0
        %1524 = vmatprep.subr.mxu0 0.0
        %1525 = vmatpush2.msra.mxu0 0.0
        %1526 = vmatprep.subr.mxu0 0.0
        %1527 = vmatpush2.msra.mxu0 0.0
        %1528 = vmatprep.subr.mxu0 0.0
        %1529 = vmatpush2.msra.mxu0 0.0
        %1530 = vmatprep.subr.mxu0 0.0
        %1531 = vmatpush2.msra.mxu0 0.0
        %1532 = vmatprep.subr.mxu0 0.0
        %1533 = vmatpush2.msra.mxu0 0.0
        %1534 = vmatprep.subr.mxu0 0.0
        %1535 = vmatpush2.msra.mxu0 0.0
        %1536 = vmatprep.subr.mxu0 0.0
        %1537 = vmatpush2.msra.mxu0 0.0
        %1538 = vmatprep.subr.mxu0 0.0
        %1539 = vmatpush2.msra.mxu0 0.0
        %1540 = vmatprep.subr.mxu0 0.0
        %1541 = vmatpush2.msra.mxu0 0.0
        %1542 = vmatprep.subr.mxu0 0.0
        %1543 = vmatpush2.msra.mxu0 0.0
        %1544 = vmatprep.subr.mxu0 0.0
        %1545 = vmatpush2.msra.mxu0 0.0
        %1546 = vmatprep.subr.mxu0 0.0
        %1547 = vmatpush2.msra.mxu0 0.0
        %1548 = vmatprep.mubr.f32.mxu0 0.0
        %v1549 = vand.u32 %v327, 4294901760
        %1550 = vmatmul.mubr.f32.gmra.mxu0 %v1549
        %v1551 = vpop.f32.mrf.mxu0
        %v1552 = vadd.f32 %v1433, %v1551
        %v1553 = vpop.f32.mrf.mxu0
        %1554 = vdwg.mxu0
        %1555 = vmatprep.subr.mxu0 0.0
        %v1556 = vand.u32 %v359, 4294901760
        %1557 = vmatpush1.msra.mxu0 %v1556
        %1558 = vmatprep.subr.mxu0 0.0
        %v1559 = vand.u32 %v358, 4294901760
        %1560 = vmatpush1.msra.mxu0 %v1559
        %1561 = vmatprep.subr.mxu0 0.0
        %v1562 = vand.u32 %v357, 4294901760
        %1563 = vmatpush1.msra.mxu0 %v1562
        %1564 = vmatprep.subr.mxu0 0.0
        %v1565 = vand.u32 %v356, 4294901760
        %1566 = vmatpush1.msra.mxu0 %v1565
        %1567 = vmatprep.subr.mxu0 0.0
        %v1568 = vand.u32 %v355, 4294901760
        %1569 = vmatpush1.msra.mxu0 %v1568
        %1570 = vmatprep.subr.mxu0 0.0
        %v1571 = vand.u32 %v354, 4294901760
        %1572 = vmatpush1.msra.mxu0 %v1571
        %1573 = vmatprep.subr.mxu0 0.0
        %v1574 = vand.u32 %v353, 4294901760
        %1575 = vmatpush1.msra.mxu0 %v1574
        %1576 = vmatprep.subr.mxu0 0.0
        %v1577 = vand.u32 %v352, 4294901760
        %1578 = vmatpush1.msra.mxu0 %v1577
        %1579 = vmatprep.subr.mxu0 0.0
        %v1580 = vand.u32 %v351, 4294901760
        %1581 = vmatpush1.msra.mxu0 %v1580
        %1582 = vmatprep.subr.mxu0 0.0
        %v1583 = vand.u32 %v350, 4294901760
        %1584 = vmatpush1.msra.mxu0 %v1583
        %1585 = vmatprep.subr.mxu0 0.0
        %v1586 = vand.u32 %v349, 4294901760
        %1587 = vmatpush1.msra.mxu0 %v1586
        %1588 = vmatprep.subr.mxu0 0.0
        %v1589 = vand.u32 %v348, 4294901760
        %1590 = vmatpush1.msra.mxu0 %v1589
        %1591 = vmatprep.subr.mxu0 0.0
        %v1592 = vand.u32 %v347, 4294901760
        %1593 = vmatpush1.msra.mxu0 %v1592
        %1594 = vmatprep.subr.mxu0 0.0
        %v1595 = vand.u32 %v346, 4294901760
        %1596 = vmatpush1.msra.mxu0 %v1595
        %1597 = vmatprep.subr.mxu0 0.0
        %v1598 = vand.u32 %v345, 4294901760
        %1599 = vmatpush1.msra.mxu0 %v1598
        %1600 = vmatprep.subr.mxu0 0.0
        %v1601 = vand.u32 %v344, 4294901760
        %1602 = vmatpush1.msra.mxu0 %v1601
        %1603 = vmatprep.subr.mxu0 0.0
        %1604 = vmatpush2.msra.mxu0 0.0
        %1605 = vmatprep.subr.mxu0 0.0
        %1606 = vmatpush2.msra.mxu0 0.0
        %1607 = vmatprep.subr.mxu0 0.0
        %1608 = vmatpush2.msra.mxu0 0.0
        %1609 = vmatprep.subr.mxu0 0.0
        %1610 = vmatpush2.msra.mxu0 0.0
        %1611 = vmatprep.subr.mxu0 0.0
        %1612 = vmatpush2.msra.mxu0 0.0
        %1613 = vmatprep.subr.mxu0 0.0
        %1614 = vmatpush2.msra.mxu0 0.0
        %1615 = vmatprep.subr.mxu0 0.0
        %1616 = vmatpush2.msra.mxu0 0.0
        %1617 = vmatprep.subr.mxu0 0.0
        %1618 = vmatpush2.msra.mxu0 0.0
        %1619 = vmatprep.subr.mxu0 0.0
        %1620 = vmatpush2.msra.mxu0 0.0
        %1621 = vmatprep.subr.mxu0 0.0
        %1622 = vmatpush2.msra.mxu0 0.0
        %1623 = vmatprep.subr.mxu0 0.0
        %1624 = vmatpush2.msra.mxu0 0.0
        %1625 = vmatprep.subr.mxu0 0.0
        %1626 = vmatpush2.msra.mxu0 0.0
        %1627 = vmatprep.subr.mxu0 0.0
        %1628 = vmatpush2.msra.mxu0 0.0
        %1629 = vmatprep.subr.mxu0 0.0
        %1630 = vmatpush2.msra.mxu0 0.0
        %1631 = vmatprep.subr.mxu0 0.0
        %1632 = vmatpush2.msra.mxu0 0.0
        %1633 = vmatprep.subr.mxu0 0.0
        %1634 = vmatpush2.msra.mxu0 0.0
        %1635 = vmatprep.mubr.f32.mxu0 0.0
        %v1636 = vand.u32 %v327, 4294901760
        %1637 = vmatmul.mubr.f32.gmra.mxu0 %v1636
        %v1638 = vpop.f32.mrf.mxu0
        %v1639 = vadd.f32 %v1552, %v1638
        %v1640 = vpop.f32.mrf.mxu0
        %1641 = vdwg.mxu0
        %v1642 = vadd.f32 %v324, %v998
        %v1643 = vadd.f32 %v325, %v1639
        %1644 = vst [vmem:[%s312] sm:$0xff] %v1642
        %1645 = vst [vmem:[%s312 + $0x8] sm:$0xff] %v1643
        // Predicated region
        $region49: #{tpu_custom_call.1} parent=31 // pred_check
          %p1646 = pneg %p318
        $region50: #{tpu_custom_call.1} parent=31 // pred_check_branch
          %1648 = sbr.rel (%p1646) target = $region52
        $region51: #{tpu_custom_call.1} parent=31 // pred_region
          %v1649 = vld [vmem:[%s312] sm:$0xff]
          %v1650 = vld [vmem:[%s312 + $0x8] sm:$0xff]
          %v1651 = vld [vmem:[%s280] sm:$0x1]
          %v1652 = vld [vmem:[%s280 + $0x1] sm:$0x1]
          %v1655 = vlaneseq
          %v1656 = vshrl.u32 %v1655, 7
          %v1657 = vsub.s32 0, %v1656
          %v1658 = vrot.slane %v1651, %v1657
          %v1659 = vlaneseq
          %v1660 = vshrl.u32 %v1659, 7
          %v1661 = vsub.s32 0, %v1660
          %v1662 = vrot.slane %v1652, %v1661
          %v1665 = vadd.f32 %v1649, %v1658
          %v1666 = vadd.f32 %v1650, %v1662
          %1667 = vst [vmem:[%s312] sm:$0xff] %v1665
          %1668 = vst [vmem:[%s312 + $0x8] sm:$0xff] %v1666
        $region52: #{tpu_custom_call.1} parent=31 // pred_fallthru
          _
        %s1669 = sand.u32 %s149, 1
        %s1670 = scalar_lea.sflag [#allocation4], %s1669
        %s1671 = sand.u32 %s149, 1
        %s1672 = smul.addr %s1671, 16
        %s1673 = scalar_lea.vmem [#allocation8], %s1672
        // Predicated region
        $region53: #{tpu_custom_call.1} parent=31 // pred_check
          %p1674 = pneg %p159
        $region54: #{tpu_custom_call.1} parent=31 // pred_check_branch
          %1676 = sbr.rel (%p1674) target = $region56
        $region55: #{tpu_custom_call.1} parent=31 // pred_region
          %s1677 = smul.u32 2, %s29
          %s1679 = ssub.s32 256, 256
          %1680 = vsyncadd %s1670, %s1679
          %s1681 = sadd.s32 %s31, %s30
          %s1682 = sadd.s32 %s1681, %s1677
          %s1683 = smul.addr %s1682, 128
          %s1684 = scalar_lea.hbm %s3, %s1683
          %s1685 = sshll.u32 %s1673, 4
          %s1686 = int_to_ptr.vmem [resolvable:$true] %s1685
          %1691 = dma.vmem_to_hbm [thread:$0]  %s1686, 256, %s1684, %s1670, 128, 128, 8
        $region56: #{tpu_custom_call.1} parent=31 // pred_fallthru
          _
      $region32: #{tpu_custom_call.1} parent=5 // pred_fallthru
        _
      %p1692 = scmp.le.s32.totalorder 2, %s18
      // Predicated region
      $region57: #{tpu_custom_call.1} parent=5 // pred_check
        %p1693 = pneg %p1692
      $region58: #{tpu_custom_call.1} parent=5 // pred_check_branch
        %1695 = sbr.rel (%p1693) target = $region60
      $region59: #{tpu_custom_call.1} parent=5 // pred_region
        %s1696 = ssub.s32 %s18, 2
        // Predicated region
        $region61: #{tpu_custom_call.1} parent=59 // pred_check
          %p1697 = pneg %p165
        $region62: #{tpu_custom_call.1} parent=59 // pred_check_branch
          %1699 = sbr.rel (%p1697) target = $region64
        $region63: #{tpu_custom_call.1} parent=59 // pred_region
          %s1700 = sand.u32 %s150, 1
          %s1701 = scalar_lea.sflag [#allocation4], %s1700
          %s1702 = sand.u32 %s150, 1
          %s1703 = smul.addr %s1702, 16
          %s1704 = scalar_lea.vmem [#allocation8], %s1703
          %1705 = dma.done %s1701, 256
        $region64: #{tpu_custom_call.1} parent=59 // pred_fallthru
          _
      $region60: #{tpu_custom_call.1} parent=5 // pred_fallthru
        _
    $region6: #{tpu_custom_call.1} parent=1 // loop_footer
      %s22 = sadd.s32 1, %s18
    $region7: #{tpu_custom_call.1} parent=1 // loop_footer_branch
      %17 = sbr.rel target = $region3
    $region8: #{tpu_custom_call.1} parent=1 // loop_exit
      _
    %1706 = vsyncpa [#allocation3], 1
    %s1707 = scalar_lea.sflag [#allocation3], 1
    %1708 = vsyncpa %s1707, 1
    %1709 = vsyncpa [#allocation6], 1
    %s1710 = scalar_lea.sflag [#allocation6], 1
    %1711 = vsyncpa %s1710, 1
    %1712 = vsyncpa [#allocation4], 1
    %s1713 = scalar_lea.sflag [#allocation4], 1
    %1714 = vsyncpa %s1713, 1

</llo_original>
